<compile_context>
chip_gen: v6e
topology: v6e:2x2x1
jax: 0.10.0
libtpu: 0.0.40
codegen_flags: <defaults>
</compile_context>

<pallas_src>
import jax
import jax.numpy as jnp
from jax import lax
from jax.experimental import pallas as pl
from jax.experimental.pallas import tpu as pltpu

KSIZE = 7
PAD = 3
LANE_TARGET = 512   # max packed lane width per grid step


def _modulate1_kernel(w_ref, x_ref, o_ref):
    # w_ref: (2*7*7,) f32     SMEM  (conv weight, flattened OIHW, O=1 squeezed)
    # x_ref: (1, C, Hp, Wt)   VMEM  (NB images packed along lanes, zero margins)
    # o_ref: (1, H, Wout)     VMEM  (packed conv output, Wout = Wt - 2*PAD)
    C = x_ref.shape[1]
    Hp = x_ref.shape[2]
    H = o_ref.shape[1]
    Wout = o_ref.shape[2]

    x = x_ref[0].astype(jnp.float32)              # (C, Hp, Wt)
    # Channel-wise max / mean.  Spatial zero padding commutes with both
    # (max/mean of all-zero columns is 0), so these planes are already the
    # zero-padded conv inputs -- no VMEM scratch, no re-zeroing.
    max_p = jnp.max(x, axis=0)                    # (Hp, Wt)
    mean_p = jnp.sum(x, axis=0) * (1.0 / C)       # (Hp, Wt)

    # Fully unrolled 2 x 7 x 7 tap loop.  Lane slices (kw) hoisted out of the
    # kh loop; 4 accumulators give the VALU independent add chains.
    accs = [jnp.zeros((H, Wout), jnp.float32) for _ in range(4)]
    for c, plane in enumerate((max_p, mean_p)):
        for kw in range(KSIZE):
            col = lax.slice(plane, (0, kw), (Hp, kw + Wout))      # (Hp, Wout)
            for kh in range(KSIZE):
                w = w_ref[c * KSIZE * KSIZE + kh * KSIZE + kw]
                win = lax.slice(col, (kh, 0), (kh + H, Wout))     # (H, Wout)
                accs[kh % 4] = accs[kh % 4] + w * win
    acc = (accs[0] + accs[1]) + (accs[2] + accs[3])

    o_ref[0] = jax.nn.sigmoid(acc).astype(o_ref.dtype)


@jax.jit
def modulate1_forward(x, weight):
    """x: (N, C, H, W) float32; weight: (1, 2, 7, 7) float32 -> (N, 1, H, W)."""
    N, C, H, W = x.shape
    Hp = H + 2 * PAD
    SEG = W + 2 * PAD                         # per-image lane segment (margins + data)

    # Pack NB images along the lane axis per grid step (lane-dense output,
    # amortizes per-step overhead).  Pad the batch to divide evenly into packs.
    NB = max(1, min(N, max(1, LANE_TARGET // SEG)))
    G = -(-N // NB)                           # number of packs = grid size
    Npad = G * NB

    # Spatial zero pad (3 each side) + batch pad with zero images.
    xp = jnp.pad(x, ((0, Npad - N), (0, 0), (PAD, PAD), (PAD, PAD)))  # (Npad,C,Hp,SEG)
    # Pack NB images side by side along lanes: 6 zero cols separate images
    # (right margin of image i + left margin of image i+1).
    xp = xp.reshape(G, NB, C, Hp, SEG).transpose(0, 2, 3, 1, 4)
    xp = xp.reshape(G, C, Hp, NB * SEG)
    # Trailing 2*PAD zero columns keep every 7-wide window of every packed
    # output column in bounds.
    xp = jnp.pad(xp, ((0, 0), (0, 0), (0, 0), (0, 2 * PAD)))          # (G,C,Hp,Wt)

    Wt = NB * SEG + 2 * PAD
    Wout = NB * SEG
    w_flat = weight.reshape(-1).astype(jnp.float32)                   # (98,)

    out_packed = pl.pallas_call(
        _modulate1_kernel,
        out_shape=jax.ShapeDtypeStruct((G, H, Wout), x.dtype),
        grid=(G,),
        in_specs=[
            pl.BlockSpec(memory_space=pltpu.MemorySpace.SMEM),        # weights
            pl.BlockSpec((1, C, Hp, Wt), lambda g: (g, 0, 0, 0)),     # x pack
        ],
        out_specs=pl.BlockSpec((1, H, Wout), lambda g: (g, 0, 0)),
        compiler_params=pltpu.CompilerParams(
            dimension_semantics=("parallel",)),   # packs are independent
    )(w_flat, xp)

    # Unpack: keep the first W columns of every SEG-wide lane segment.
    out = out_packed.reshape(G, H, NB, SEG)[..., :W]                  # (G, H, NB, W)
    out = out.transpose(0, 2, 1, 3).reshape(Npad, H, W)[:N]           # (N, H, W)
    return out[:, None, :, :]                                         # (N, 1, H, W)


def _reference(x, weight):
    max_c = jnp.max(x, axis=1, keepdims=True)
    mean_c = jnp.mean(x, axis=1, keepdims=True)
    scale = jnp.concatenate([max_c, mean_c], axis=1)
    out = lax.conv_general_dilated(
        scale, weight, window_strides=(1, 1),
        padding=[(PAD, PAD), (PAD, PAD)],
        dimension_numbers=("NCHW", "OIHW", "NCHW"))
    return jax.nn.sigmoid(out)


if __name__ == "__main__":
    key = jax.random.PRNGKey(0)
    k_x, k_w = jax.random.split(key)

    N, C, H, W = 2, 4, 16, 16
    x = jax.random.normal(k_x, (N, C, H, W), dtype=jnp.float32)

    # Deterministic Conv2d(2, 1, 7, padding=3, bias=False) weight init
    # (Kaiming-uniform-like bound = 1/sqrt(fan_in), fan_in = 2*7*7).
    bound = 1.0 / jnp.sqrt(2.0 * KSIZE * KSIZE)
    weight = jax.random.uniform(
        k_w, (1, 2, KSIZE, KSIZE), dtype=jnp.float32,
        minval=-bound, maxval=bound)

    out = jax.block_until_ready(modulate1_forward(x, weight))
    ref = jax.block_until_ready(_reference(x, weight))

    assert out.shape == (N, 1, H, W)
    assert jnp.allclose(out, ref, rtol=1e-5, atol=1e-5)

    print("KERNEL_OK")
</pallas_src>

<mosaic_0001>
module attributes {stable_mosaic.version = 11 : i64} {
  func.func @_modulate1_kernel(%arg0: i32, %arg1: memref<98xf32, #tpu.memory_space<smem>>, %arg2: memref<1x4x22x50xf32, #tpu.memory_space<vmem>>, %arg3: memref<1x16x44xf32, #tpu.memory_space<vmem>>) attributes {dimension_semantics = [#tpu.dimension_semantics<parallel>], iteration_bounds = array<i64: 1>, scalar_prefetch = 0 : i64, scratch_operands = 0 : i64, tpu.core_type = #tpu.core_type<tc>, window_params = [{transform_indices = @transform_0, window_bounds = array<i64: 98>}, {transform_indices = @transform_1, window_bounds = array<i64: 1, 4, 22, 50>}, {transform_indices = @transform_2, window_bounds = array<i64: 1, 16, 44>}]} {
    %c0 = arith.constant 0 : index
    %c0_0 = arith.constant 0 : index
    %c0_1 = arith.constant 0 : index
    %c0_2 = arith.constant 0 : index
    %0 = vector.load %arg2[%c0, %c0_0, %c0_1, %c0_2] : memref<1x4x22x50xf32, #tpu.memory_space<vmem>>, vector<1x4x22x50xf32>
    %1 = vector.shape_cast %0 : vector<1x4x22x50xf32> to vector<4x22x50xf32>
    %cst = arith.constant dense<0xFF800000> : vector<22x50xf32>
    %2 = vector.multi_reduction <maximumf>, %1, %cst [0] : vector<4x22x50xf32> to vector<22x50xf32>
    %cst_3 = arith.constant dense<0.000000e+00> : vector<22x50xf32>
    %3 = vector.multi_reduction <add>, %1, %cst_3 [0] : vector<4x22x50xf32> to vector<22x50xf32>
    %cst_4 = arith.constant 2.500000e-01 : f32
    %4 = vector.broadcast %cst_4 : f32 to vector<22x50xf32>
    %5 = arith.mulf %3, %4 : vector<22x50xf32>
    %cst_5 = arith.constant 0.000000e+00 : f32
    %6 = vector.broadcast %cst_5 : f32 to vector<16x44xf32>
    %cst_6 = arith.constant 0.000000e+00 : f32
    %7 = vector.broadcast %cst_6 : f32 to vector<16x44xf32>
    %cst_7 = arith.constant 0.000000e+00 : f32
    %8 = vector.broadcast %cst_7 : f32 to vector<16x44xf32>
    %cst_8 = arith.constant 0.000000e+00 : f32
    %9 = vector.broadcast %cst_8 : f32 to vector<16x44xf32>
    %10 = vector.extract_strided_slice %2 {offsets = [0, 0], sizes = [22, 44], strides = [1, 1]} : vector<22x50xf32> to vector<22x44xf32>
    %c0_9 = arith.constant 0 : index
    %11 = memref.load %arg1[%c0_9] : memref<98xf32, #tpu.memory_space<smem>>
    %12 = vector.extract_strided_slice %10 {offsets = [0, 0], sizes = [16, 44], strides = [1, 1]} : vector<22x44xf32> to vector<16x44xf32>
    %13 = vector.broadcast %11 : f32 to vector<16x44xf32>
    %14 = arith.mulf %13, %12 : vector<16x44xf32>
    %15 = arith.addf %6, %14 : vector<16x44xf32>
    %c7 = arith.constant 7 : index
    %16 = memref.load %arg1[%c7] : memref<98xf32, #tpu.memory_space<smem>>
    %17 = vector.extract_strided_slice %10 {offsets = [1, 0], sizes = [16, 44], strides = [1, 1]} : vector<22x44xf32> to vector<16x44xf32>
    %18 = vector.broadcast %16 : f32 to vector<16x44xf32>
    %19 = arith.mulf %18, %17 : vector<16x44xf32>
    %20 = arith.addf %7, %19 : vector<16x44xf32>
    %c14 = arith.constant 14 : index
    %21 = memref.load %arg1[%c14] : memref<98xf32, #tpu.memory_space<smem>>
    %22 = vector.extract_strided_slice %10 {offsets = [2, 0], sizes = [16, 44], strides = [1, 1]} : vector<22x44xf32> to vector<16x44xf32>
    %23 = vector.broadcast %21 : f32 to vector<16x44xf32>
    %24 = arith.mulf %23, %22 : vector<16x44xf32>
    %25 = arith.addf %8, %24 : vector<16x44xf32>
    %c21 = arith.constant 21 : index
    %26 = memref.load %arg1[%c21] : memref<98xf32, #tpu.memory_space<smem>>
    %27 = vector.extract_strided_slice %10 {offsets = [3, 0], sizes = [16, 44], strides = [1, 1]} : vector<22x44xf32> to vector<16x44xf32>
    %28 = vector.broadcast %26 : f32 to vector<16x44xf32>
    %29 = arith.mulf %28, %27 : vector<16x44xf32>
    %30 = arith.addf %9, %29 : vector<16x44xf32>
    %c28 = arith.constant 28 : index
    %31 = memref.load %arg1[%c28] : memref<98xf32, #tpu.memory_space<smem>>
    %32 = vector.extract_strided_slice %10 {offsets = [4, 0], sizes = [16, 44], strides = [1, 1]} : vector<22x44xf32> to vector<16x44xf32>
    %33 = vector.broadcast %31 : f32 to vector<16x44xf32>
    %34 = arith.mulf %33, %32 : vector<16x44xf32>
    %35 = arith.addf %15, %34 : vector<16x44xf32>
    %c35 = arith.constant 35 : index
    %36 = memref.load %arg1[%c35] : memref<98xf32, #tpu.memory_space<smem>>
    %37 = vector.extract_strided_slice %10 {offsets = [5, 0], sizes = [16, 44], strides = [1, 1]} : vector<22x44xf32> to vector<16x44xf32>
    %38 = vector.broadcast %36 : f32 to vector<16x44xf32>
    %39 = arith.mulf %38, %37 : vector<16x44xf32>
    %40 = arith.addf %20, %39 : vector<16x44xf32>
    %c42 = arith.constant 42 : index
    %41 = memref.load %arg1[%c42] : memref<98xf32, #tpu.memory_space<smem>>
    %42 = vector.extract_strided_slice %10 {offsets = [6, 0], sizes = [16, 44], strides = [1, 1]} : vector<22x44xf32> to vector<16x44xf32>
    %43 = vector.broadcast %41 : f32 to vector<16x44xf32>
    %44 = arith.mulf %43, %42 : vector<16x44xf32>
    %45 = arith.addf %25, %44 : vector<16x44xf32>
    %46 = vector.extract_strided_slice %2 {offsets = [0, 1], sizes = [22, 44], strides = [1, 1]} : vector<22x50xf32> to vector<22x44xf32>
    %c1 = arith.constant 1 : index
    %47 = memref.load %arg1[%c1] : memref<98xf32, #tpu.memory_space<smem>>
    %48 = vector.extract_strided_slice %46 {offsets = [0, 0], sizes = [16, 44], strides = [1, 1]} : vector<22x44xf32> to vector<16x44xf32>
    %49 = vector.broadcast %47 : f32 to vector<16x44xf32>
    %50 = arith.mulf %49, %48 : vector<16x44xf32>
    %51 = arith.addf %35, %50 : vector<16x44xf32>
    %c8 = arith.constant 8 : index
    %52 = memref.load %arg1[%c8] : memref<98xf32, #tpu.memory_space<smem>>
    %53 = vector.extract_strided_slice %46 {offsets = [1, 0], sizes = [16, 44], strides = [1, 1]} : vector<22x44xf32> to vector<16x44xf32>
    %54 = vector.broadcast %52 : f32 to vector<16x44xf32>
    %55 = arith.mulf %54, %53 : vector<16x44xf32>
    %56 = arith.addf %40, %55 : vector<16x44xf32>
    %c15 = arith.constant 15 : index
    %57 = memref.load %arg1[%c15] : memref<98xf32, #tpu.memory_space<smem>>
    %58 = vector.extract_strided_slice %46 {offsets = [2, 0], sizes = [16, 44], strides = [1, 1]} : vector<22x44xf32> to vector<16x44xf32>
    %59 = vector.broadcast %57 : f32 to vector<16x44xf32>
    %60 = arith.mulf %59, %58 : vector<16x44xf32>
    %61 = arith.addf %45, %60 : vector<16x44xf32>
    %c22 = arith.constant 22 : index
    %62 = memref.load %arg1[%c22] : memref<98xf32, #tpu.memory_space<smem>>
    %63 = vector.extract_strided_slice %46 {offsets = [3, 0], sizes = [16, 44], strides = [1, 1]} : vector<22x44xf32> to vector<16x44xf32>
    %64 = vector.broadcast %62 : f32 to vector<16x44xf32>
    %65 = arith.mulf %64, %63 : vector<16x44xf32>
    %66 = arith.addf %30, %65 : vector<16x44xf32>
    %c29 = arith.constant 29 : index
    %67 = memref.load %arg1[%c29] : memref<98xf32, #tpu.memory_space<smem>>
    %68 = vector.extract_strided_slice %46 {offsets = [4, 0], sizes = [16, 44], strides = [1, 1]} : vector<22x44xf32> to vector<16x44xf32>
    %69 = vector.broadcast %67 : f32 to vector<16x44xf32>
    %70 = arith.mulf %69, %68 : vector<16x44xf32>
    %71 = arith.addf %51, %70 : vector<16x44xf32>
    %c36 = arith.constant 36 : index
    %72 = memref.load %arg1[%c36] : memref<98xf32, #tpu.memory_space<smem>>
    %73 = vector.extract_strided_slice %46 {offsets = [5, 0], sizes = [16, 44], strides = [1, 1]} : vector<22x44xf32> to vector<16x44xf32>
    %74 = vector.broadcast %72 : f32 to vector<16x44xf32>
    %75 = arith.mulf %74, %73 : vector<16x44xf32>
    %76 = arith.addf %56, %75 : vector<16x44xf32>
    %c43 = arith.constant 43 : index
    %77 = memref.load %arg1[%c43] : memref<98xf32, #tpu.memory_space<smem>>
    %78 = vector.extract_strided_slice %46 {offsets = [6, 0], sizes = [16, 44], strides = [1, 1]} : vector<22x44xf32> to vector<16x44xf32>
    %79 = vector.broadcast %77 : f32 to vector<16x44xf32>
    %80 = arith.mulf %79, %78 : vector<16x44xf32>
    %81 = arith.addf %61, %80 : vector<16x44xf32>
    %82 = vector.extract_strided_slice %2 {offsets = [0, 2], sizes = [22, 44], strides = [1, 1]} : vector<22x50xf32> to vector<22x44xf32>
    %c2 = arith.constant 2 : index
    %83 = memref.load %arg1[%c2] : memref<98xf32, #tpu.memory_space<smem>>
    %84 = vector.extract_strided_slice %82 {offsets = [0, 0], sizes = [16, 44], strides = [1, 1]} : vector<22x44xf32> to vector<16x44xf32>
    %85 = vector.broadcast %83 : f32 to vector<16x44xf32>
    %86 = arith.mulf %85, %84 : vector<16x44xf32>
    %87 = arith.addf %71, %86 : vector<16x44xf32>
    %c9 = arith.constant 9 : index
    %88 = memref.load %arg1[%c9] : memref<98xf32, #tpu.memory_space<smem>>
    %89 = vector.extract_strided_slice %82 {offsets = [1, 0], sizes = [16, 44], strides = [1, 1]} : vector<22x44xf32> to vector<16x44xf32>
    %90 = vector.broadcast %88 : f32 to vector<16x44xf32>
    %91 = arith.mulf %90, %89 : vector<16x44xf32>
    %92 = arith.addf %76, %91 : vector<16x44xf32>
    %c16 = arith.constant 16 : index
    %93 = memref.load %arg1[%c16] : memref<98xf32, #tpu.memory_space<smem>>
    %94 = vector.extract_strided_slice %82 {offsets = [2, 0], sizes = [16, 44], strides = [1, 1]} : vector<22x44xf32> to vector<16x44xf32>
    %95 = vector.broadcast %93 : f32 to vector<16x44xf32>
    %96 = arith.mulf %95, %94 : vector<16x44xf32>
    %97 = arith.addf %81, %96 : vector<16x44xf32>
    %c23 = arith.constant 23 : index
    %98 = memref.load %arg1[%c23] : memref<98xf32, #tpu.memory_space<smem>>
    %99 = vector.extract_strided_slice %82 {offsets = [3, 0], sizes = [16, 44], strides = [1, 1]} : vector<22x44xf32> to vector<16x44xf32>
    %100 = vector.broadcast %98 : f32 to vector<16x44xf32>
    %101 = arith.mulf %100, %99 : vector<16x44xf32>
    %102 = arith.addf %66, %101 : vector<16x44xf32>
    %c30 = arith.constant 30 : index
    %103 = memref.load %arg1[%c30] : memref<98xf32, #tpu.memory_space<smem>>
    %104 = vector.extract_strided_slice %82 {offsets = [4, 0], sizes = [16, 44], strides = [1, 1]} : vector<22x44xf32> to vector<16x44xf32>
    %105 = vector.broadcast %103 : f32 to vector<16x44xf32>
    %106 = arith.mulf %105, %104 : vector<16x44xf32>
    %107 = arith.addf %87, %106 : vector<16x44xf32>
    %c37 = arith.constant 37 : index
    %108 = memref.load %arg1[%c37] : memref<98xf32, #tpu.memory_space<smem>>
    %109 = vector.extract_strided_slice %82 {offsets = [5, 0], sizes = [16, 44], strides = [1, 1]} : vector<22x44xf32> to vector<16x44xf32>
    %110 = vector.broadcast %108 : f32 to vector<16x44xf32>
    %111 = arith.mulf %110, %109 : vector<16x44xf32>
    %112 = arith.addf %92, %111 : vector<16x44xf32>
    %c44 = arith.constant 44 : index
    %113 = memref.load %arg1[%c44] : memref<98xf32, #tpu.memory_space<smem>>
    %114 = vector.extract_strided_slice %82 {offsets = [6, 0], sizes = [16, 44], strides = [1, 1]} : vector<22x44xf32> to vector<16x44xf32>
    %115 = vector.broadcast %113 : f32 to vector<16x44xf32>
    %116 = arith.mulf %115, %114 : vector<16x44xf32>
    %117 = arith.addf %97, %116 : vector<16x44xf32>
    %118 = vector.extract_strided_slice %2 {offsets = [0, 3], sizes = [22, 44], strides = [1, 1]} : vector<22x50xf32> to vector<22x44xf32>
    %c3 = arith.constant 3 : index
    %119 = memref.load %arg1[%c3] : memref<98xf32, #tpu.memory_space<smem>>
    %120 = vector.extract_strided_slice %118 {offsets = [0, 0], sizes = [16, 44], strides = [1, 1]} : vector<22x44xf32> to vector<16x44xf32>
    %121 = vector.broadcast %119 : f32 to vector<16x44xf32>
    %122 = arith.mulf %121, %120 : vector<16x44xf32>
    %123 = arith.addf %107, %122 : vector<16x44xf32>
    %c10 = arith.constant 10 : index
    %124 = memref.load %arg1[%c10] : memref<98xf32, #tpu.memory_space<smem>>
    %125 = vector.extract_strided_slice %118 {offsets = [1, 0], sizes = [16, 44], strides = [1, 1]} : vector<22x44xf32> to vector<16x44xf32>
    %126 = vector.broadcast %124 : f32 to vector<16x44xf32>
    %127 = arith.mulf %126, %125 : vector<16x44xf32>
    %128 = arith.addf %112, %127 : vector<16x44xf32>
    %c17 = arith.constant 17 : index
    %129 = memref.load %arg1[%c17] : memref<98xf32, #tpu.memory_space<smem>>
    %130 = vector.extract_strided_slice %118 {offsets = [2, 0], sizes = [16, 44], strides = [1, 1]} : vector<22x44xf32> to vector<16x44xf32>
    %131 = vector.broadcast %129 : f32 to vector<16x44xf32>
    %132 = arith.mulf %131, %130 : vector<16x44xf32>
    %133 = arith.addf %117, %132 : vector<16x44xf32>
    %c24 = arith.constant 24 : index
    %134 = memref.load %arg1[%c24] : memref<98xf32, #tpu.memory_space<smem>>
    %135 = vector.extract_strided_slice %118 {offsets = [3, 0], sizes = [16, 44], strides = [1, 1]} : vector<22x44xf32> to vector<16x44xf32>
    %136 = vector.broadcast %134 : f32 to vector<16x44xf32>
    %137 = arith.mulf %136, %135 : vector<16x44xf32>
    %138 = arith.addf %102, %137 : vector<16x44xf32>
    %c31 = arith.constant 31 : index
    %139 = memref.load %arg1[%c31] : memref<98xf32, #tpu.memory_space<smem>>
    %140 = vector.extract_strided_slice %118 {offsets = [4, 0], sizes = [16, 44], strides = [1, 1]} : vector<22x44xf32> to vector<16x44xf32>
    %141 = vector.broadcast %139 : f32 to vector<16x44xf32>
    %142 = arith.mulf %141, %140 : vector<16x44xf32>
    %143 = arith.addf %123, %142 : vector<16x44xf32>
    %c38 = arith.constant 38 : index
    %144 = memref.load %arg1[%c38] : memref<98xf32, #tpu.memory_space<smem>>
    %145 = vector.extract_strided_slice %118 {offsets = [5, 0], sizes = [16, 44], strides = [1, 1]} : vector<22x44xf32> to vector<16x44xf32>
    %146 = vector.broadcast %144 : f32 to vector<16x44xf32>
    %147 = arith.mulf %146, %145 : vector<16x44xf32>
    %148 = arith.addf %128, %147 : vector<16x44xf32>
    %c45 = arith.constant 45 : index
    %149 = memref.load %arg1[%c45] : memref<98xf32, #tpu.memory_space<smem>>
    %150 = vector.extract_strided_slice %118 {offsets = [6, 0], sizes = [16, 44], strides = [1, 1]} : vector<22x44xf32> to vector<16x44xf32>
    %151 = vector.broadcast %149 : f32 to vector<16x44xf32>
    %152 = arith.mulf %151, %150 : vector<16x44xf32>
    %153 = arith.addf %133, %152 : vector<16x44xf32>
    %154 = vector.extract_strided_slice %2 {offsets = [0, 4], sizes = [22, 44], strides = [1, 1]} : vector<22x50xf32> to vector<22x44xf32>
    %c4 = arith.constant 4 : index
    %155 = memref.load %arg1[%c4] : memref<98xf32, #tpu.memory_space<smem>>
    %156 = vector.extract_strided_slice %154 {offsets = [0, 0], sizes = [16, 44], strides = [1, 1]} : vector<22x44xf32> to vector<16x44xf32>
    %157 = vector.broadcast %155 : f32 to vector<16x44xf32>
    %158 = arith.mulf %157, %156 : vector<16x44xf32>
    %159 = arith.addf %143, %158 : vector<16x44xf32>
    %c11 = arith.constant 11 : index
    %160 = memref.load %arg1[%c11] : memref<98xf32, #tpu.memory_space<smem>>
    %161 = vector.extract_strided_slice %154 {offsets = [1, 0], sizes = [16, 44], strides = [1, 1]} : vector<22x44xf32> to vector<16x44xf32>
    %162 = vector.broadcast %160 : f32 to vector<16x44xf32>
    %163 = arith.mulf %162, %161 : vector<16x44xf32>
    %164 = arith.addf %148, %163 : vector<16x44xf32>
    %c18 = arith.constant 18 : index
    %165 = memref.load %arg1[%c18] : memref<98xf32, #tpu.memory_space<smem>>
    %166 = vector.extract_strided_slice %154 {offsets = [2, 0], sizes = [16, 44], strides = [1, 1]} : vector<22x44xf32> to vector<16x44xf32>
    %167 = vector.broadcast %165 : f32 to vector<16x44xf32>
    %168 = arith.mulf %167, %166 : vector<16x44xf32>
    %169 = arith.addf %153, %168 : vector<16x44xf32>
    %c25 = arith.constant 25 : index
    %170 = memref.load %arg1[%c25] : memref<98xf32, #tpu.memory_space<smem>>
    %171 = vector.extract_strided_slice %154 {offsets = [3, 0], sizes = [16, 44], strides = [1, 1]} : vector<22x44xf32> to vector<16x44xf32>
    %172 = vector.broadcast %170 : f32 to vector<16x44xf32>
    %173 = arith.mulf %172, %171 : vector<16x44xf32>
    %174 = arith.addf %138, %173 : vector<16x44xf32>
    %c32 = arith.constant 32 : index
    %175 = memref.load %arg1[%c32] : memref<98xf32, #tpu.memory_space<smem>>
    %176 = vector.extract_strided_slice %154 {offsets = [4, 0], sizes = [16, 44], strides = [1, 1]} : vector<22x44xf32> to vector<16x44xf32>
    %177 = vector.broadcast %175 : f32 to vector<16x44xf32>
    %178 = arith.mulf %177, %176 : vector<16x44xf32>
    %179 = arith.addf %159, %178 : vector<16x44xf32>
    %c39 = arith.constant 39 : index
    %180 = memref.load %arg1[%c39] : memref<98xf32, #tpu.memory_space<smem>>
    %181 = vector.extract_strided_slice %154 {offsets = [5, 0], sizes = [16, 44], strides = [1, 1]} : vector<22x44xf32> to vector<16x44xf32>
    %182 = vector.broadcast %180 : f32 to vector<16x44xf32>
    %183 = arith.mulf %182, %181 : vector<16x44xf32>
    %184 = arith.addf %164, %183 : vector<16x44xf32>
    %c46 = arith.constant 46 : index
    %185 = memref.load %arg1[%c46] : memref<98xf32, #tpu.memory_space<smem>>
    %186 = vector.extract_strided_slice %154 {offsets = [6, 0], sizes = [16, 44], strides = [1, 1]} : vector<22x44xf32> to vector<16x44xf32>
    %187 = vector.broadcast %185 : f32 to vector<16x44xf32>
    %188 = arith.mulf %187, %186 : vector<16x44xf32>
    %189 = arith.addf %169, %188 : vector<16x44xf32>
    %190 = vector.extract_strided_slice %2 {offsets = [0, 5], sizes = [22, 44], strides = [1, 1]} : vector<22x50xf32> to vector<22x44xf32>
    %c5 = arith.constant 5 : index
    %191 = memref.load %arg1[%c5] : memref<98xf32, #tpu.memory_space<smem>>
    %192 = vector.extract_strided_slice %190 {offsets = [0, 0], sizes = [16, 44], strides = [1, 1]} : vector<22x44xf32> to vector<16x44xf32>
    %193 = vector.broadcast %191 : f32 to vector<16x44xf32>
    %194 = arith.mulf %193, %192 : vector<16x44xf32>
    %195 = arith.addf %179, %194 : vector<16x44xf32>
    %c12 = arith.constant 12 : index
    %196 = memref.load %arg1[%c12] : memref<98xf32, #tpu.memory_space<smem>>
    %197 = vector.extract_strided_slice %190 {offsets = [1, 0], sizes = [16, 44], strides = [1, 1]} : vector<22x44xf32> to vector<16x44xf32>
    %198 = vector.broadcast %196 : f32 to vector<16x44xf32>
    %199 = arith.mulf %198, %197 : vector<16x44xf32>
    %200 = arith.addf %184, %199 : vector<16x44xf32>
    %c19 = arith.constant 19 : index
    %201 = memref.load %arg1[%c19] : memref<98xf32, #tpu.memory_space<smem>>
    %202 = vector.extract_strided_slice %190 {offsets = [2, 0], sizes = [16, 44], strides = [1, 1]} : vector<22x44xf32> to vector<16x44xf32>
    %203 = vector.broadcast %201 : f32 to vector<16x44xf32>
    %204 = arith.mulf %203, %202 : vector<16x44xf32>
    %205 = arith.addf %189, %204 : vector<16x44xf32>
    %c26 = arith.constant 26 : index
    %206 = memref.load %arg1[%c26] : memref<98xf32, #tpu.memory_space<smem>>
    %207 = vector.extract_strided_slice %190 {offsets = [3, 0], sizes = [16, 44], strides = [1, 1]} : vector<22x44xf32> to vector<16x44xf32>
    %208 = vector.broadcast %206 : f32 to vector<16x44xf32>
    %209 = arith.mulf %208, %207 : vector<16x44xf32>
    %210 = arith.addf %174, %209 : vector<16x44xf32>
    %c33 = arith.constant 33 : index
    %211 = memref.load %arg1[%c33] : memref<98xf32, #tpu.memory_space<smem>>
    %212 = vector.extract_strided_slice %190 {offsets = [4, 0], sizes = [16, 44], strides = [1, 1]} : vector<22x44xf32> to vector<16x44xf32>
    %213 = vector.broadcast %211 : f32 to vector<16x44xf32>
    %214 = arith.mulf %213, %212 : vector<16x44xf32>
    %215 = arith.addf %195, %214 : vector<16x44xf32>
    %c40 = arith.constant 40 : index
    %216 = memref.load %arg1[%c40] : memref<98xf32, #tpu.memory_space<smem>>
    %217 = vector.extract_strided_slice %190 {offsets = [5, 0], sizes = [16, 44], strides = [1, 1]} : vector<22x44xf32> to vector<16x44xf32>
    %218 = vector.broadcast %216 : f32 to vector<16x44xf32>
    %219 = arith.mulf %218, %217 : vector<16x44xf32>
    %220 = arith.addf %200, %219 : vector<16x44xf32>
    %c47 = arith.constant 47 : index
    %221 = memref.load %arg1[%c47] : memref<98xf32, #tpu.memory_space<smem>>
    %222 = vector.extract_strided_slice %190 {offsets = [6, 0], sizes = [16, 44], strides = [1, 1]} : vector<22x44xf32> to vector<16x44xf32>
    %223 = vector.broadcast %221 : f32 to vector<16x44xf32>
    %224 = arith.mulf %223, %222 : vector<16x44xf32>
    %225 = arith.addf %205, %224 : vector<16x44xf32>
    %226 = vector.extract_strided_slice %2 {offsets = [0, 6], sizes = [22, 44], strides = [1, 1]} : vector<22x50xf32> to vector<22x44xf32>
    %c6 = arith.constant 6 : index
    %227 = memref.load %arg1[%c6] : memref<98xf32, #tpu.memory_space<smem>>
    %228 = vector.extract_strided_slice %226 {offsets = [0, 0], sizes = [16, 44], strides = [1, 1]} : vector<22x44xf32> to vector<16x44xf32>
    %229 = vector.broadcast %227 : f32 to vector<16x44xf32>
    %230 = arith.mulf %229, %228 : vector<16x44xf32>
    %231 = arith.addf %215, %230 : vector<16x44xf32>
    %c13 = arith.constant 13 : index
    %232 = memref.load %arg1[%c13] : memref<98xf32, #tpu.memory_space<smem>>
    %233 = vector.extract_strided_slice %226 {offsets = [1, 0], sizes = [16, 44], strides = [1, 1]} : vector<22x44xf32> to vector<16x44xf32>
    %234 = vector.broadcast %232 : f32 to vector<16x44xf32>
    %235 = arith.mulf %234, %233 : vector<16x44xf32>
    %236 = arith.addf %220, %235 : vector<16x44xf32>
    %c20 = arith.constant 20 : index
    %237 = memref.load %arg1[%c20] : memref<98xf32, #tpu.memory_space<smem>>
    %238 = vector.extract_strided_slice %226 {offsets = [2, 0], sizes = [16, 44], strides = [1, 1]} : vector<22x44xf32> to vector<16x44xf32>
    %239 = vector.broadcast %237 : f32 to vector<16x44xf32>
    %240 = arith.mulf %239, %238 : vector<16x44xf32>
    %241 = arith.addf %225, %240 : vector<16x44xf32>
    %c27 = arith.constant 27 : index
    %242 = memref.load %arg1[%c27] : memref<98xf32, #tpu.memory_space<smem>>
    %243 = vector.extract_strided_slice %226 {offsets = [3, 0], sizes = [16, 44], strides = [1, 1]} : vector<22x44xf32> to vector<16x44xf32>
    %244 = vector.broadcast %242 : f32 to vector<16x44xf32>
    %245 = arith.mulf %244, %243 : vector<16x44xf32>
    %246 = arith.addf %210, %245 : vector<16x44xf32>
    %c34 = arith.constant 34 : index
    %247 = memref.load %arg1[%c34] : memref<98xf32, #tpu.memory_space<smem>>
    %248 = vector.extract_strided_slice %226 {offsets = [4, 0], sizes = [16, 44], strides = [1, 1]} : vector<22x44xf32> to vector<16x44xf32>
    %249 = vector.broadcast %247 : f32 to vector<16x44xf32>
    %250 = arith.mulf %249, %248 : vector<16x44xf32>
    %251 = arith.addf %231, %250 : vector<16x44xf32>
    %c41 = arith.constant 41 : index
    %252 = memref.load %arg1[%c41] : memref<98xf32, #tpu.memory_space<smem>>
    %253 = vector.extract_strided_slice %226 {offsets = [5, 0], sizes = [16, 44], strides = [1, 1]} : vector<22x44xf32> to vector<16x44xf32>
    %254 = vector.broadcast %252 : f32 to vector<16x44xf32>
    %255 = arith.mulf %254, %253 : vector<16x44xf32>
    %256 = arith.addf %236, %255 : vector<16x44xf32>
    %c48 = arith.constant 48 : index
    %257 = memref.load %arg1[%c48] : memref<98xf32, #tpu.memory_space<smem>>
    %258 = vector.extract_strided_slice %226 {offsets = [6, 0], sizes = [16, 44], strides = [1, 1]} : vector<22x44xf32> to vector<16x44xf32>
    %259 = vector.broadcast %257 : f32 to vector<16x44xf32>
    %260 = arith.mulf %259, %258 : vector<16x44xf32>
    %261 = arith.addf %241, %260 : vector<16x44xf32>
    %262 = vector.extract_strided_slice %5 {offsets = [0, 0], sizes = [22, 44], strides = [1, 1]} : vector<22x50xf32> to vector<22x44xf32>
    %c49 = arith.constant 49 : index
    %263 = memref.load %arg1[%c49] : memref<98xf32, #tpu.memory_space<smem>>
    %264 = vector.extract_strided_slice %262 {offsets = [0, 0], sizes = [16, 44], strides = [1, 1]} : vector<22x44xf32> to vector<16x44xf32>
    %265 = vector.broadcast %263 : f32 to vector<16x44xf32>
    %266 = arith.mulf %265, %264 : vector<16x44xf32>
    %267 = arith.addf %251, %266 : vector<16x44xf32>
    %c56 = arith.constant 56 : index
    %268 = memref.load %arg1[%c56] : memref<98xf32, #tpu.memory_space<smem>>
    %269 = vector.extract_strided_slice %262 {offsets = [1, 0], sizes = [16, 44], strides = [1, 1]} : vector<22x44xf32> to vector<16x44xf32>
    %270 = vector.broadcast %268 : f32 to vector<16x44xf32>
    %271 = arith.mulf %270, %269 : vector<16x44xf32>
    %272 = arith.addf %256, %271 : vector<16x44xf32>
    %c63 = arith.constant 63 : index
    %273 = memref.load %arg1[%c63] : memref<98xf32, #tpu.memory_space<smem>>
    %274 = vector.extract_strided_slice %262 {offsets = [2, 0], sizes = [16, 44], strides = [1, 1]} : vector<22x44xf32> to vector<16x44xf32>
    %275 = vector.broadcast %273 : f32 to vector<16x44xf32>
    %276 = arith.mulf %275, %274 : vector<16x44xf32>
    %277 = arith.addf %261, %276 : vector<16x44xf32>
    %c70 = arith.constant 70 : index
    %278 = memref.load %arg1[%c70] : memref<98xf32, #tpu.memory_space<smem>>
    %279 = vector.extract_strided_slice %262 {offsets = [3, 0], sizes = [16, 44], strides = [1, 1]} : vector<22x44xf32> to vector<16x44xf32>
    %280 = vector.broadcast %278 : f32 to vector<16x44xf32>
    %281 = arith.mulf %280, %279 : vector<16x44xf32>
    %282 = arith.addf %246, %281 : vector<16x44xf32>
    %c77 = arith.constant 77 : index
    %283 = memref.load %arg1[%c77] : memref<98xf32, #tpu.memory_space<smem>>
    %284 = vector.extract_strided_slice %262 {offsets = [4, 0], sizes = [16, 44], strides = [1, 1]} : vector<22x44xf32> to vector<16x44xf32>
    %285 = vector.broadcast %283 : f32 to vector<16x44xf32>
    %286 = arith.mulf %285, %284 : vector<16x44xf32>
    %287 = arith.addf %267, %286 : vector<16x44xf32>
    %c84 = arith.constant 84 : index
    %288 = memref.load %arg1[%c84] : memref<98xf32, #tpu.memory_space<smem>>
    %289 = vector.extract_strided_slice %262 {offsets = [5, 0], sizes = [16, 44], strides = [1, 1]} : vector<22x44xf32> to vector<16x44xf32>
    %290 = vector.broadcast %288 : f32 to vector<16x44xf32>
    %291 = arith.mulf %290, %289 : vector<16x44xf32>
    %292 = arith.addf %272, %291 : vector<16x44xf32>
    %c91 = arith.constant 91 : index
    %293 = memref.load %arg1[%c91] : memref<98xf32, #tpu.memory_space<smem>>
    %294 = vector.extract_strided_slice %262 {offsets = [6, 0], sizes = [16, 44], strides = [1, 1]} : vector<22x44xf32> to vector<16x44xf32>
    %295 = vector.broadcast %293 : f32 to vector<16x44xf32>
    %296 = arith.mulf %295, %294 : vector<16x44xf32>
    %297 = arith.addf %277, %296 : vector<16x44xf32>
    %298 = vector.extract_strided_slice %5 {offsets = [0, 1], sizes = [22, 44], strides = [1, 1]} : vector<22x50xf32> to vector<22x44xf32>
    %c50 = arith.constant 50 : index
    %299 = memref.load %arg1[%c50] : memref<98xf32, #tpu.memory_space<smem>>
    %300 = vector.extract_strided_slice %298 {offsets = [0, 0], sizes = [16, 44], strides = [1, 1]} : vector<22x44xf32> to vector<16x44xf32>
    %301 = vector.broadcast %299 : f32 to vector<16x44xf32>
    %302 = arith.mulf %301, %300 : vector<16x44xf32>
    %303 = arith.addf %287, %302 : vector<16x44xf32>
    %c57 = arith.constant 57 : index
    %304 = memref.load %arg1[%c57] : memref<98xf32, #tpu.memory_space<smem>>
    %305 = vector.extract_strided_slice %298 {offsets = [1, 0], sizes = [16, 44], strides = [1, 1]} : vector<22x44xf32> to vector<16x44xf32>
    %306 = vector.broadcast %304 : f32 to vector<16x44xf32>
    %307 = arith.mulf %306, %305 : vector<16x44xf32>
    %308 = arith.addf %292, %307 : vector<16x44xf32>
    %c64 = arith.constant 64 : index
    %309 = memref.load %arg1[%c64] : memref<98xf32, #tpu.memory_space<smem>>
    %310 = vector.extract_strided_slice %298 {offsets = [2, 0], sizes = [16, 44], strides = [1, 1]} : vector<22x44xf32> to vector<16x44xf32>
    %311 = vector.broadcast %309 : f32 to vector<16x44xf32>
    %312 = arith.mulf %311, %310 : vector<16x44xf32>
    %313 = arith.addf %297, %312 : vector<16x44xf32>
    %c71 = arith.constant 71 : index
    %314 = memref.load %arg1[%c71] : memref<98xf32, #tpu.memory_space<smem>>
    %315 = vector.extract_strided_slice %298 {offsets = [3, 0], sizes = [16, 44], strides = [1, 1]} : vector<22x44xf32> to vector<16x44xf32>
    %316 = vector.broadcast %314 : f32 to vector<16x44xf32>
    %317 = arith.mulf %316, %315 : vector<16x44xf32>
    %318 = arith.addf %282, %317 : vector<16x44xf32>
    %c78 = arith.constant 78 : index
    %319 = memref.load %arg1[%c78] : memref<98xf32, #tpu.memory_space<smem>>
    %320 = vector.extract_strided_slice %298 {offsets = [4, 0], sizes = [16, 44], strides = [1, 1]} : vector<22x44xf32> to vector<16x44xf32>
    %321 = vector.broadcast %319 : f32 to vector<16x44xf32>
    %322 = arith.mulf %321, %320 : vector<16x44xf32>
    %323 = arith.addf %303, %322 : vector<16x44xf32>
    %c85 = arith.constant 85 : index
    %324 = memref.load %arg1[%c85] : memref<98xf32, #tpu.memory_space<smem>>
    %325 = vector.extract_strided_slice %298 {offsets = [5, 0], sizes = [16, 44], strides = [1, 1]} : vector<22x44xf32> to vector<16x44xf32>
    %326 = vector.broadcast %324 : f32 to vector<16x44xf32>
    %327 = arith.mulf %326, %325 : vector<16x44xf32>
    %328 = arith.addf %308, %327 : vector<16x44xf32>
    %c92 = arith.constant 92 : index
    %329 = memref.load %arg1[%c92] : memref<98xf32, #tpu.memory_space<smem>>
    %330 = vector.extract_strided_slice %298 {offsets = [6, 0], sizes = [16, 44], strides = [1, 1]} : vector<22x44xf32> to vector<16x44xf32>
    %331 = vector.broadcast %329 : f32 to vector<16x44xf32>
    %332 = arith.mulf %331, %330 : vector<16x44xf32>
    %333 = arith.addf %313, %332 : vector<16x44xf32>
    %334 = vector.extract_strided_slice %5 {offsets = [0, 2], sizes = [22, 44], strides = [1, 1]} : vector<22x50xf32> to vector<22x44xf32>
    %c51 = arith.constant 51 : index
    %335 = memref.load %arg1[%c51] : memref<98xf32, #tpu.memory_space<smem>>
    %336 = vector.extract_strided_slice %334 {offsets = [0, 0], sizes = [16, 44], strides = [1, 1]} : vector<22x44xf32> to vector<16x44xf32>
    %337 = vector.broadcast %335 : f32 to vector<16x44xf32>
    %338 = arith.mulf %337, %336 : vector<16x44xf32>
    %339 = arith.addf %323, %338 : vector<16x44xf32>
    %c58 = arith.constant 58 : index
    %340 = memref.load %arg1[%c58] : memref<98xf32, #tpu.memory_space<smem>>
    %341 = vector.extract_strided_slice %334 {offsets = [1, 0], sizes = [16, 44], strides = [1, 1]} : vector<22x44xf32> to vector<16x44xf32>
    %342 = vector.broadcast %340 : f32 to vector<16x44xf32>
    %343 = arith.mulf %342, %341 : vector<16x44xf32>
    %344 = arith.addf %328, %343 : vector<16x44xf32>
    %c65 = arith.constant 65 : index
    %345 = memref.load %arg1[%c65] : memref<98xf32, #tpu.memory_space<smem>>
    %346 = vector.extract_strided_slice %334 {offsets = [2, 0], sizes = [16, 44], strides = [1, 1]} : vector<22x44xf32> to vector<16x44xf32>
    %347 = vector.broadcast %345 : f32 to vector<16x44xf32>
    %348 = arith.mulf %347, %346 : vector<16x44xf32>
    %349 = arith.addf %333, %348 : vector<16x44xf32>
    %c72 = arith.constant 72 : index
    %350 = memref.load %arg1[%c72] : memref<98xf32, #tpu.memory_space<smem>>
    %351 = vector.extract_strided_slice %334 {offsets = [3, 0], sizes = [16, 44], strides = [1, 1]} : vector<22x44xf32> to vector<16x44xf32>
    %352 = vector.broadcast %350 : f32 to vector<16x44xf32>
    %353 = arith.mulf %352, %351 : vector<16x44xf32>
    %354 = arith.addf %318, %353 : vector<16x44xf32>
    %c79 = arith.constant 79 : index
    %355 = memref.load %arg1[%c79] : memref<98xf32, #tpu.memory_space<smem>>
    %356 = vector.extract_strided_slice %334 {offsets = [4, 0], sizes = [16, 44], strides = [1, 1]} : vector<22x44xf32> to vector<16x44xf32>
    %357 = vector.broadcast %355 : f32 to vector<16x44xf32>
    %358 = arith.mulf %357, %356 : vector<16x44xf32>
    %359 = arith.addf %339, %358 : vector<16x44xf32>
    %c86 = arith.constant 86 : index
    %360 = memref.load %arg1[%c86] : memref<98xf32, #tpu.memory_space<smem>>
    %361 = vector.extract_strided_slice %334 {offsets = [5, 0], sizes = [16, 44], strides = [1, 1]} : vector<22x44xf32> to vector<16x44xf32>
    %362 = vector.broadcast %360 : f32 to vector<16x44xf32>
    %363 = arith.mulf %362, %361 : vector<16x44xf32>
    %364 = arith.addf %344, %363 : vector<16x44xf32>
    %c93 = arith.constant 93 : index
    %365 = memref.load %arg1[%c93] : memref<98xf32, #tpu.memory_space<smem>>
    %366 = vector.extract_strided_slice %334 {offsets = [6, 0], sizes = [16, 44], strides = [1, 1]} : vector<22x44xf32> to vector<16x44xf32>
    %367 = vector.broadcast %365 : f32 to vector<16x44xf32>
    %368 = arith.mulf %367, %366 : vector<16x44xf32>
    %369 = arith.addf %349, %368 : vector<16x44xf32>
    %370 = vector.extract_strided_slice %5 {offsets = [0, 3], sizes = [22, 44], strides = [1, 1]} : vector<22x50xf32> to vector<22x44xf32>
    %c52 = arith.constant 52 : index
    %371 = memref.load %arg1[%c52] : memref<98xf32, #tpu.memory_space<smem>>
    %372 = vector.extract_strided_slice %370 {offsets = [0, 0], sizes = [16, 44], strides = [1, 1]} : vector<22x44xf32> to vector<16x44xf32>
    %373 = vector.broadcast %371 : f32 to vector<16x44xf32>
    %374 = arith.mulf %373, %372 : vector<16x44xf32>
    %375 = arith.addf %359, %374 : vector<16x44xf32>
    %c59 = arith.constant 59 : index
    %376 = memref.load %arg1[%c59] : memref<98xf32, #tpu.memory_space<smem>>
    %377 = vector.extract_strided_slice %370 {offsets = [1, 0], sizes = [16, 44], strides = [1, 1]} : vector<22x44xf32> to vector<16x44xf32>
    %378 = vector.broadcast %376 : f32 to vector<16x44xf32>
    %379 = arith.mulf %378, %377 : vector<16x44xf32>
    %380 = arith.addf %364, %379 : vector<16x44xf32>
    %c66 = arith.constant 66 : index
    %381 = memref.load %arg1[%c66] : memref<98xf32, #tpu.memory_space<smem>>
    %382 = vector.extract_strided_slice %370 {offsets = [2, 0], sizes = [16, 44], strides = [1, 1]} : vector<22x44xf32> to vector<16x44xf32>
    %383 = vector.broadcast %381 : f32 to vector<16x44xf32>
    %384 = arith.mulf %383, %382 : vector<16x44xf32>
    %385 = arith.addf %369, %384 : vector<16x44xf32>
    %c73 = arith.constant 73 : index
    %386 = memref.load %arg1[%c73] : memref<98xf32, #tpu.memory_space<smem>>
    %387 = vector.extract_strided_slice %370 {offsets = [3, 0], sizes = [16, 44], strides = [1, 1]} : vector<22x44xf32> to vector<16x44xf32>
    %388 = vector.broadcast %386 : f32 to vector<16x44xf32>
    %389 = arith.mulf %388, %387 : vector<16x44xf32>
    %390 = arith.addf %354, %389 : vector<16x44xf32>
    %c80 = arith.constant 80 : index
    %391 = memref.load %arg1[%c80] : memref<98xf32, #tpu.memory_space<smem>>
    %392 = vector.extract_strided_slice %370 {offsets = [4, 0], sizes = [16, 44], strides = [1, 1]} : vector<22x44xf32> to vector<16x44xf32>
    %393 = vector.broadcast %391 : f32 to vector<16x44xf32>
    %394 = arith.mulf %393, %392 : vector<16x44xf32>
    %395 = arith.addf %375, %394 : vector<16x44xf32>
    %c87 = arith.constant 87 : index
    %396 = memref.load %arg1[%c87] : memref<98xf32, #tpu.memory_space<smem>>
    %397 = vector.extract_strided_slice %370 {offsets = [5, 0], sizes = [16, 44], strides = [1, 1]} : vector<22x44xf32> to vector<16x44xf32>
    %398 = vector.broadcast %396 : f32 to vector<16x44xf32>
    %399 = arith.mulf %398, %397 : vector<16x44xf32>
    %400 = arith.addf %380, %399 : vector<16x44xf32>
    %c94 = arith.constant 94 : index
    %401 = memref.load %arg1[%c94] : memref<98xf32, #tpu.memory_space<smem>>
    %402 = vector.extract_strided_slice %370 {offsets = [6, 0], sizes = [16, 44], strides = [1, 1]} : vector<22x44xf32> to vector<16x44xf32>
    %403 = vector.broadcast %401 : f32 to vector<16x44xf32>
    %404 = arith.mulf %403, %402 : vector<16x44xf32>
    %405 = arith.addf %385, %404 : vector<16x44xf32>
    %406 = vector.extract_strided_slice %5 {offsets = [0, 4], sizes = [22, 44], strides = [1, 1]} : vector<22x50xf32> to vector<22x44xf32>
    %c53 = arith.constant 53 : index
    %407 = memref.load %arg1[%c53] : memref<98xf32, #tpu.memory_space<smem>>
    %408 = vector.extract_strided_slice %406 {offsets = [0, 0], sizes = [16, 44], strides = [1, 1]} : vector<22x44xf32> to vector<16x44xf32>
    %409 = vector.broadcast %407 : f32 to vector<16x44xf32>
    %410 = arith.mulf %409, %408 : vector<16x44xf32>
    %411 = arith.addf %395, %410 : vector<16x44xf32>
    %c60 = arith.constant 60 : index
    %412 = memref.load %arg1[%c60] : memref<98xf32, #tpu.memory_space<smem>>
    %413 = vector.extract_strided_slice %406 {offsets = [1, 0], sizes = [16, 44], strides = [1, 1]} : vector<22x44xf32> to vector<16x44xf32>
    %414 = vector.broadcast %412 : f32 to vector<16x44xf32>
    %415 = arith.mulf %414, %413 : vector<16x44xf32>
    %416 = arith.addf %400, %415 : vector<16x44xf32>
    %c67 = arith.constant 67 : index
    %417 = memref.load %arg1[%c67] : memref<98xf32, #tpu.memory_space<smem>>
    %418 = vector.extract_strided_slice %406 {offsets = [2, 0], sizes = [16, 44], strides = [1, 1]} : vector<22x44xf32> to vector<16x44xf32>
    %419 = vector.broadcast %417 : f32 to vector<16x44xf32>
    %420 = arith.mulf %419, %418 : vector<16x44xf32>
    %421 = arith.addf %405, %420 : vector<16x44xf32>
    %c74 = arith.constant 74 : index
    %422 = memref.load %arg1[%c74] : memref<98xf32, #tpu.memory_space<smem>>
    %423 = vector.extract_strided_slice %406 {offsets = [3, 0], sizes = [16, 44], strides = [1, 1]} : vector<22x44xf32> to vector<16x44xf32>
    %424 = vector.broadcast %422 : f32 to vector<16x44xf32>
    %425 = arith.mulf %424, %423 : vector<16x44xf32>
    %426 = arith.addf %390, %425 : vector<16x44xf32>
    %c81 = arith.constant 81 : index
    %427 = memref.load %arg1[%c81] : memref<98xf32, #tpu.memory_space<smem>>
    %428 = vector.extract_strided_slice %406 {offsets = [4, 0], sizes = [16, 44], strides = [1, 1]} : vector<22x44xf32> to vector<16x44xf32>
    %429 = vector.broadcast %427 : f32 to vector<16x44xf32>
    %430 = arith.mulf %429, %428 : vector<16x44xf32>
    %431 = arith.addf %411, %430 : vector<16x44xf32>
    %c88 = arith.constant 88 : index
    %432 = memref.load %arg1[%c88] : memref<98xf32, #tpu.memory_space<smem>>
    %433 = vector.extract_strided_slice %406 {offsets = [5, 0], sizes = [16, 44], strides = [1, 1]} : vector<22x44xf32> to vector<16x44xf32>
    %434 = vector.broadcast %432 : f32 to vector<16x44xf32>
    %435 = arith.mulf %434, %433 : vector<16x44xf32>
    %436 = arith.addf %416, %435 : vector<16x44xf32>
    %c95 = arith.constant 95 : index
    %437 = memref.load %arg1[%c95] : memref<98xf32, #tpu.memory_space<smem>>
    %438 = vector.extract_strided_slice %406 {offsets = [6, 0], sizes = [16, 44], strides = [1, 1]} : vector<22x44xf32> to vector<16x44xf32>
    %439 = vector.broadcast %437 : f32 to vector<16x44xf32>
    %440 = arith.mulf %439, %438 : vector<16x44xf32>
    %441 = arith.addf %421, %440 : vector<16x44xf32>
    %442 = vector.extract_strided_slice %5 {offsets = [0, 5], sizes = [22, 44], strides = [1, 1]} : vector<22x50xf32> to vector<22x44xf32>
    %c54 = arith.constant 54 : index
    %443 = memref.load %arg1[%c54] : memref<98xf32, #tpu.memory_space<smem>>
    %444 = vector.extract_strided_slice %442 {offsets = [0, 0], sizes = [16, 44], strides = [1, 1]} : vector<22x44xf32> to vector<16x44xf32>
    %445 = vector.broadcast %443 : f32 to vector<16x44xf32>
    %446 = arith.mulf %445, %444 : vector<16x44xf32>
    %447 = arith.addf %431, %446 : vector<16x44xf32>
    %c61 = arith.constant 61 : index
    %448 = memref.load %arg1[%c61] : memref<98xf32, #tpu.memory_space<smem>>
    %449 = vector.extract_strided_slice %442 {offsets = [1, 0], sizes = [16, 44], strides = [1, 1]} : vector<22x44xf32> to vector<16x44xf32>
    %450 = vector.broadcast %448 : f32 to vector<16x44xf32>
    %451 = arith.mulf %450, %449 : vector<16x44xf32>
    %452 = arith.addf %436, %451 : vector<16x44xf32>
    %c68 = arith.constant 68 : index
    %453 = memref.load %arg1[%c68] : memref<98xf32, #tpu.memory_space<smem>>
    %454 = vector.extract_strided_slice %442 {offsets = [2, 0], sizes = [16, 44], strides = [1, 1]} : vector<22x44xf32> to vector<16x44xf32>
    %455 = vector.broadcast %453 : f32 to vector<16x44xf32>
    %456 = arith.mulf %455, %454 : vector<16x44xf32>
    %457 = arith.addf %441, %456 : vector<16x44xf32>
    %c75 = arith.constant 75 : index
    %458 = memref.load %arg1[%c75] : memref<98xf32, #tpu.memory_space<smem>>
    %459 = vector.extract_strided_slice %442 {offsets = [3, 0], sizes = [16, 44], strides = [1, 1]} : vector<22x44xf32> to vector<16x44xf32>
    %460 = vector.broadcast %458 : f32 to vector<16x44xf32>
    %461 = arith.mulf %460, %459 : vector<16x44xf32>
    %462 = arith.addf %426, %461 : vector<16x44xf32>
    %c82 = arith.constant 82 : index
    %463 = memref.load %arg1[%c82] : memref<98xf32, #tpu.memory_space<smem>>
    %464 = vector.extract_strided_slice %442 {offsets = [4, 0], sizes = [16, 44], strides = [1, 1]} : vector<22x44xf32> to vector<16x44xf32>
    %465 = vector.broadcast %463 : f32 to vector<16x44xf32>
    %466 = arith.mulf %465, %464 : vector<16x44xf32>
    %467 = arith.addf %447, %466 : vector<16x44xf32>
    %c89 = arith.constant 89 : index
    %468 = memref.load %arg1[%c89] : memref<98xf32, #tpu.memory_space<smem>>
    %469 = vector.extract_strided_slice %442 {offsets = [5, 0], sizes = [16, 44], strides = [1, 1]} : vector<22x44xf32> to vector<16x44xf32>
    %470 = vector.broadcast %468 : f32 to vector<16x44xf32>
    %471 = arith.mulf %470, %469 : vector<16x44xf32>
    %472 = arith.addf %452, %471 : vector<16x44xf32>
    %c96 = arith.constant 96 : index
    %473 = memref.load %arg1[%c96] : memref<98xf32, #tpu.memory_space<smem>>
    %474 = vector.extract_strided_slice %442 {offsets = [6, 0], sizes = [16, 44], strides = [1, 1]} : vector<22x44xf32> to vector<16x44xf32>
    %475 = vector.broadcast %473 : f32 to vector<16x44xf32>
    %476 = arith.mulf %475, %474 : vector<16x44xf32>
    %477 = arith.addf %457, %476 : vector<16x44xf32>
    %478 = vector.extract_strided_slice %5 {offsets = [0, 6], sizes = [22, 44], strides = [1, 1]} : vector<22x50xf32> to vector<22x44xf32>
    %c55 = arith.constant 55 : index
    %479 = memref.load %arg1[%c55] : memref<98xf32, #tpu.memory_space<smem>>
    %480 = vector.extract_strided_slice %478 {offsets = [0, 0], sizes = [16, 44], strides = [1, 1]} : vector<22x44xf32> to vector<16x44xf32>
    %481 = vector.broadcast %479 : f32 to vector<16x44xf32>
    %482 = arith.mulf %481, %480 : vector<16x44xf32>
    %483 = arith.addf %467, %482 : vector<16x44xf32>
    %c62 = arith.constant 62 : index
    %484 = memref.load %arg1[%c62] : memref<98xf32, #tpu.memory_space<smem>>
    %485 = vector.extract_strided_slice %478 {offsets = [1, 0], sizes = [16, 44], strides = [1, 1]} : vector<22x44xf32> to vector<16x44xf32>
    %486 = vector.broadcast %484 : f32 to vector<16x44xf32>
    %487 = arith.mulf %486, %485 : vector<16x44xf32>
    %488 = arith.addf %472, %487 : vector<16x44xf32>
    %c69 = arith.constant 69 : index
    %489 = memref.load %arg1[%c69] : memref<98xf32, #tpu.memory_space<smem>>
    %490 = vector.extract_strided_slice %478 {offsets = [2, 0], sizes = [16, 44], strides = [1, 1]} : vector<22x44xf32> to vector<16x44xf32>
    %491 = vector.broadcast %489 : f32 to vector<16x44xf32>
    %492 = arith.mulf %491, %490 : vector<16x44xf32>
    %493 = arith.addf %477, %492 : vector<16x44xf32>
    %c76 = arith.constant 76 : index
    %494 = memref.load %arg1[%c76] : memref<98xf32, #tpu.memory_space<smem>>
    %495 = vector.extract_strided_slice %478 {offsets = [3, 0], sizes = [16, 44], strides = [1, 1]} : vector<22x44xf32> to vector<16x44xf32>
    %496 = vector.broadcast %494 : f32 to vector<16x44xf32>
    %497 = arith.mulf %496, %495 : vector<16x44xf32>
    %498 = arith.addf %462, %497 : vector<16x44xf32>
    %c83 = arith.constant 83 : index
    %499 = memref.load %arg1[%c83] : memref<98xf32, #tpu.memory_space<smem>>
    %500 = vector.extract_strided_slice %478 {offsets = [4, 0], sizes = [16, 44], strides = [1, 1]} : vector<22x44xf32> to vector<16x44xf32>
    %501 = vector.broadcast %499 : f32 to vector<16x44xf32>
    %502 = arith.mulf %501, %500 : vector<16x44xf32>
    %503 = arith.addf %483, %502 : vector<16x44xf32>
    %c90 = arith.constant 90 : index
    %504 = memref.load %arg1[%c90] : memref<98xf32, #tpu.memory_space<smem>>
    %505 = vector.extract_strided_slice %478 {offsets = [5, 0], sizes = [16, 44], strides = [1, 1]} : vector<22x44xf32> to vector<16x44xf32>
    %506 = vector.broadcast %504 : f32 to vector<16x44xf32>
    %507 = arith.mulf %506, %505 : vector<16x44xf32>
    %508 = arith.addf %488, %507 : vector<16x44xf32>
    %c97 = arith.constant 97 : index
    %509 = memref.load %arg1[%c97] : memref<98xf32, #tpu.memory_space<smem>>
    %510 = vector.extract_strided_slice %478 {offsets = [6, 0], sizes = [16, 44], strides = [1, 1]} : vector<22x44xf32> to vector<16x44xf32>
    %511 = vector.broadcast %509 : f32 to vector<16x44xf32>
    %512 = arith.mulf %511, %510 : vector<16x44xf32>
    %513 = arith.addf %493, %512 : vector<16x44xf32>
    %514 = arith.addf %503, %508 : vector<16x44xf32>
    %515 = arith.addf %513, %498 : vector<16x44xf32>
    %516 = arith.addf %514, %515 : vector<16x44xf32>
    %517 = arith.negf %516 : vector<16x44xf32>
    %518 = math.exp %517 : vector<16x44xf32>
    %cst_10 = arith.constant 1.000000e+00 : f32
    %519 = vector.broadcast %cst_10 : f32 to vector<16x44xf32>
    %520 = arith.addf %519, %518 : vector<16x44xf32>
    %521 = arith.divf %519, %520 : vector<16x44xf32>
    %c0_11 = arith.constant 0 : index
    %c0_12 = arith.constant 0 : index
    %c0_13 = arith.constant 0 : index
    %522 = vector.load %arg3[%c0_11, %c0_12, %c0_13] : memref<1x16x44xf32, #tpu.memory_space<vmem>>, vector<1x16x44xf32>
    %523 = vector.shape_cast %522 : vector<1x16x44xf32> to vector<16x44xf32>
    %524 = vector.shape_cast %521 : vector<16x44xf32> to vector<1x16x44xf32>
    tpu.vector_store %arg3[%c0_11, %c0_12, %c0_13], %524 {strides = array<i32>} : memref<1x16x44xf32, #tpu.memory_space<vmem>>, vector<1x16x44xf32>,
    return
  }
  func.func @transform_0(%arg0: i32) -> i32 {
    %c0_i32 = arith.constant 0 : i32
    %c0_i32_0 = arith.constant 0 : i32
    return %c0_i32 : i32
  }
  func.func @transform_1(%arg0: i32) -> (i32, i32, i32, i32) {
    %c0_i32 = arith.constant 0 : i32
    %c0_i32_0 = arith.constant 0 : i32
    %c0_i32_1 = arith.constant 0 : i32
    %c0_i32_2 = arith.constant 0 : i32
    return %arg0, %c0_i32, %c0_i32_0, %c0_i32_1 : i32, i32, i32, i32
  }
  func.func @transform_2(%arg0: i32) -> (i32, i32, i32) {
    %c0_i32 = arith.constant 0 : i32
    %c0_i32_0 = arith.constant 0 : i32
    %c0_i32_1 = arith.constant 0 : i32
    return %arg0, %c0_i32, %c0_i32_0 : i32, i32, i32
  }
}

</mosaic_0001>

<llo_original>
// kernel: modulate1_forward.1
$region0: #{modulate1_forward.1}
  #allocation0 [shape = 'u32[]', space=smem, size = 0x4, offset = 0x4, fixed_abs, tag = 'smem constant byte address 0x4 - core index']
  #allocation1 [shape = 'u32[144,128]{1,0:T(1,128)}', space=vmem, size = 0x12000, scoped, tag = 'internal scratch']
  %s0 = inlined_call_operand.vmem [shape: f32[98], index: 0, kind: input, shape index: {}]
  %s1 = inlined_call_operand.vmem [shape: f32[1,4,22,50], index: 1, kind: input, shape index: {}]
  %s2 = inlined_call_operand.vmem [shape: f32[1,16,44], index: 2, kind: output, shape index: {}]
  %s3 = sld [smem:[#allocation0]]
  $region22: #{modulate1_forward.1} parent=0
    _
  %s5 = ssub.s32 1, %s3
  %s6 = scalar_select 0, %s5, %s3
  $region1: #{modulate1_forward.1} parent=0
    #allocation2 [shape = 'u8[512]{0}', space=smem, size = 0x200, scoped, tag = 'input window, operand 0, single buffered']
    #allocation3 [shape = 's32[1]{0}', space=sflag, size = 0x4, scoped, tag = 'scoped memory for modulate1_forward.1']
    %7 = vsyncpa [#allocation3], 0
    // Predicated region
    $region2: #{modulate1_forward.1} parent=1 // pred_check
      _
    $region3: #{modulate1_forward.1} parent=1 // pred_check_branch
      %9 = sbr.rel (0) target = $region5
    $region4: #{modulate1_forward.1} parent=1 // pred_region
      %s11 = ssub.s32 16, 16
      %12 = vsyncadd [#allocation3], %s11
      %s14 = sshll.u32 %s0, 4
      %s15 = int_to_ptr.vmem [resolvable:$true] %s14
      %17 = dma.vmem_to_smem %s15, 16, [#allocation2], [#allocation3]
    $region5: #{modulate1_forward.1} parent=1 // pred_fallthru
      _
    // Predicated region
    $region6: #{modulate1_forward.1} parent=1 // pred_check
      _
    $region7: #{modulate1_forward.1} parent=1 // pred_check_branch
      %19 = sbr.rel (0) target = $region9
    $region8: #{modulate1_forward.1} parent=1 // pred_region
      _
    $region9: #{modulate1_forward.1} parent=1 // pred_fallthru
      _
    // Predicated region
    $region10: #{modulate1_forward.1} parent=1 // pred_check
      _
    $region11: #{modulate1_forward.1} parent=1 // pred_check_branch
      %21 = sbr.rel (0) target = $region13
    $region12: #{modulate1_forward.1} parent=1 // pred_region
      %22 = dma.done [#allocation3], 16
    $region13: #{modulate1_forward.1} parent=1 // pred_fallthru
      _
    %23 = sfence
    %v24 = vld [vmem:[%s1] sm:$0xff]
    %v25 = vld [vmem:[%s1 + $0x8] sm:$0xff]
    %v26 = vld [vmem:[%s1 + $0x10] sm:$0x3f]
    %v27 = vld [vmem:[%s1 + $0x18] sm:$0xff]
    %v28 = vld [vmem:[%s1 + $0x20] sm:$0xff]
    %v29 = vld [vmem:[%s1 + $0x28] sm:$0x3f]
    %v30 = vld [vmem:[%s1 + $0x30] sm:$0xff]
    %v31 = vld [vmem:[%s1 + $0x38] sm:$0xff]
    %v32 = vld [vmem:[%s1 + $0x40] sm:$0x3f]
    %v33 = vld [vmem:[%s1 + $0x48] sm:$0xff]
    %v34 = vld [vmem:[%s1 + $0x50] sm:$0xff]
    %v35 = vld [vmem:[%s1 + $0x58] sm:$0x3f]
    %vm36 = vcmask 408576
    %v37 = vsel %vm36, %v24, -inf
    %v38 = vsel %vm36, %v27, -inf
    %v39 = vsel %vm36, %v30, -inf
    %v40 = vmax.f32 %v37, %v39
    %v41 = vsel %vm36, %v33, -inf
    %v42 = vmax.f32 %v38, %v41
    %v43 = vmax.f32 %v40, %v42
    %v44 = vsel %vm36, %v25, -inf
    %v45 = vsel %vm36, %v28, -inf
    %v46 = vsel %vm36, %v31, -inf
    %v47 = vmax.f32 %v44, %v46
    %v48 = vsel %vm36, %v34, -inf
    %v49 = vmax.f32 %v45, %v48
    %v50 = vmax.f32 %v47, %v49
    %vm51 = vcmask 406528
    %v52 = vsel %vm51, %v26, -inf
    %v53 = vsel %vm51, %v29, -inf
    %v54 = vsel %vm51, %v32, -inf
    %v55 = vmax.f32 %v52, %v54
    %v56 = vsel %vm51, %v35, -inf
    %v57 = vmax.f32 %v53, %v56
    %v58 = vmax.f32 %v55, %v57
    %v59 = vsel %vm36, %v24, 0.0
    %v60 = vsel %vm36, %v27, 0.0
    %v61 = vadd.f32 %v59, %v60
    %v62 = vsel %vm36, %v30, 0.0
    %v63 = vadd.f32 %v61, %v62
    %v64 = vsel %vm36, %v33, 0.0
    %v65 = vadd.f32 %v63, %v64
    %v66 = vsel %vm36, %v25, 0.0
    %v67 = vsel %vm36, %v28, 0.0
    %v68 = vadd.f32 %v66, %v67
    %v69 = vsel %vm36, %v31, 0.0
    %v70 = vadd.f32 %v68, %v69
    %v71 = vsel %vm36, %v34, 0.0
    %v72 = vadd.f32 %v70, %v71
    %v73 = vsel %vm51, %v26, 0.0
    %v74 = vsel %vm51, %v29, 0.0
    %v75 = vadd.f32 %v73, %v74
    %v76 = vsel %vm51, %v32, 0.0
    %v77 = vadd.f32 %v75, %v76
    %v78 = vsel %vm51, %v35, 0.0
    %v79 = vadd.f32 %v77, %v78
    %v80 = vmul.f32 %v65, 0.25
    %v81 = vmul.f32 %v72, 0.25
    %v82 = vmul.f32 %v79, 0.25
    %s83 = sld [smem:[#allocation2]]
    %v84 = vstv %s83
    %v85 = vmul.f32 %v84, %v43
    %v86 = vmul.f32 %v84, %v50
    %v87 = vadd.f32 %v85, 0.0
    %v88 = vadd.f32 %v86, 0.0
    %s89 = sld [smem:[#allocation2 + $0x7]]
    %v90 = vstv %s89
    %v91 = vmul.f32 %v90, %v43
    %v92 = vmul.f32 %v90, %v50
    %v93 = vmul.f32 %v90, %v58
    %v94 = vadd.f32 %v91, 0.0
    %v95 = vadd.f32 %v92, 0.0
    %v96 = vadd.f32 %v93, 0.0
    %s97 = sld [smem:[#allocation2 + $0xe]]
    %v98 = vstv %s97
    %v99 = vmul.f32 %v98, %v43
    %v100 = vmul.f32 %v98, %v50
    %v101 = vmul.f32 %v98, %v58
    %v102 = vadd.f32 %v99, 0.0
    %v103 = vadd.f32 %v100, 0.0
    %v104 = vadd.f32 %v101, 0.0
    %s105 = sld [smem:[#allocation2 + $0x15]]
    %v106 = vstv %s105
    %v107 = vmul.f32 %v106, %v43
    %v108 = vmul.f32 %v106, %v50
    %v109 = vmul.f32 %v106, %v58
    %v110 = vadd.f32 %v107, 0.0
    %v111 = vadd.f32 %v108, 0.0
    %v112 = vadd.f32 %v109, 0.0
    %s113 = sld [smem:[#allocation2 + $0x1c]]
    %v114 = vstv %s113
    %v115 = vmul.f32 %v114, %v43
    %v116 = vmul.f32 %v114, %v50
    %v117 = vmul.f32 %v114, %v58
    %vm121 = vcmask 1043456
    %v122 = vrot.slane %v115, 4
    %v123 = vrot.slane %v116, 4
    %v124 = vsel %vm121, %v122, %v123
    %v125 = vrot.slane %v117, 4
    %v126 = vsel %vm121, %v123, %v125
    %v129 = vadd.f32 %v87, %v124
    %v130 = vadd.f32 %v88, %v126
    %s131 = sld [smem:[#allocation2 + $0x23]]
    %v132 = vstv %s131
    %v133 = vmul.f32 %v132, %v43
    %v134 = vmul.f32 %v132, %v50
    %v135 = vmul.f32 %v132, %v58
    %v139 = vrot.slane %v133, 4
    %v140 = vrot.slane %v134, 4
    %v141 = vsel %vm121, %v139, %v140
    %v142 = vrot.slane %v135, 4
    %v143 = vsel %vm121, %v140, %v142
    %v147 = vadd.f32 %v94, %v141
    %v148 = vadd.f32 %v95, %v143
    %v149 = vadd.f32 %v96, %v142
    %s150 = sld [smem:[#allocation2 + $0x2a]]
    %v151 = vstv %s150
    %v152 = vmul.f32 %v151, %v43
    %v153 = vmul.f32 %v151, %v50
    %v154 = vmul.f32 %v151, %v58
    %v158 = vrot.slane %v152, 4
    %v159 = vrot.slane %v153, 4
    %v160 = vsel %vm121, %v158, %v159
    %v161 = vrot.slane %v154, 4
    %v162 = vsel %vm121, %v159, %v161
    %v166 = vadd.f32 %v102, %v160
    %v167 = vadd.f32 %v103, %v162
    %v168 = vadd.f32 %v104, %v161
    %s169 = sld [smem:[#allocation2 + $0x1]]
    %v170 = vstv %s169
    %v171 = vmul.f32 %v170, %v43
    %v172 = vmul.f32 %v170, %v50
    %175 = vrot.lane.b32.xlu0 %v171, 127
    %v176 = vpop.permute.xlu0 %175
    %177 = vrot.lane.b32.xlu0 %v172, 127
    %v178 = vpop.permute.xlu0 %177
    %v181 = vadd.f32 %v129, %v176
    %v182 = vadd.f32 %v130, %v178
    %s183 = sld [smem:[#allocation2 + $0x8]]
    %v184 = vstv %s183
    %v185 = vmul.f32 %v184, %v43
    %v186 = vmul.f32 %v184, %v50
    %v187 = vmul.f32 %v184, %v58
    %191 = vrot.lane.b32.xlu0 %v185, 127
    %v192 = vpop.permute.xlu0 %191
    %193 = vrot.lane.b32.xlu0 %v186, 127
    %v194 = vpop.permute.xlu0 %193
    %195 = vrot.lane.b32.xlu0 %v187, 127
    %v196 = vpop.permute.xlu0 %195
    %v200 = vadd.f32 %v147, %v192
    %v201 = vadd.f32 %v148, %v194
    %v202 = vadd.f32 %v149, %v196
    %s203 = sld [smem:[#allocation2 + $0xf]]
    %v204 = vstv %s203
    %v205 = vmul.f32 %v204, %v43
    %v206 = vmul.f32 %v204, %v50
    %v207 = vmul.f32 %v204, %v58
    %211 = vrot.lane.b32.xlu0 %v205, 127
    %v212 = vpop.permute.xlu0 %211
    %213 = vrot.lane.b32.xlu0 %v206, 127
    %v214 = vpop.permute.xlu0 %213
    %215 = vrot.lane.b32.xlu0 %v207, 127
    %v216 = vpop.permute.xlu0 %215
    %v220 = vadd.f32 %v166, %v212
    %v221 = vadd.f32 %v167, %v214
    %v222 = vadd.f32 %v168, %v216
    %s223 = sld [smem:[#allocation2 + $0x16]]
    %v224 = vstv %s223
    %v225 = vmul.f32 %v224, %v43
    %v226 = vmul.f32 %v224, %v50
    %v227 = vmul.f32 %v224, %v58
    %231 = vrot.lane.b32.xlu0 %v225, 127
    %v232 = vpop.permute.xlu0 %231
    %233 = vrot.lane.b32.xlu0 %v226, 127
    %v234 = vpop.permute.xlu0 %233
    %235 = vrot.lane.b32.xlu0 %v227, 127
    %v236 = vpop.permute.xlu0 %235
    %v240 = vadd.f32 %v110, %v232
    %v241 = vadd.f32 %v111, %v234
    %v242 = vadd.f32 %v112, %v236
    %s243 = sld [smem:[#allocation2 + $0x1d]]
    %v244 = vstv %s243
    %v245 = vmul.f32 %v244, %v43
    %v246 = vmul.f32 %v244, %v50
    %v247 = vmul.f32 %v244, %v58
    %v251 = vrot.slane %v245, 4
    %v252 = vrot.slane %v246, 4
    %v253 = vsel %vm121, %v251, %v252
    %v254 = vrot.slane %v247, 4
    %v255 = vsel %vm121, %v252, %v254
    %256 = vrot.lane.b32.xlu0 %v253, 127
    %v257 = vpop.permute.xlu0 %256
    %258 = vrot.lane.b32.xlu0 %v255, 127
    %v259 = vpop.permute.xlu0 %258
    %v262 = vadd.f32 %v181, %v257
    %v263 = vadd.f32 %v182, %v259
    %s264 = sld [smem:[#allocation2 + $0x24]]
    %v265 = vstv %s264
    %v266 = vmul.f32 %v265, %v43
    %v267 = vmul.f32 %v265, %v50
    %v268 = vmul.f32 %v265, %v58
    %v272 = vrot.slane %v266, 4
    %v273 = vrot.slane %v267, 4
    %v274 = vsel %vm121, %v272, %v273
    %v275 = vrot.slane %v268, 4
    %v276 = vsel %vm121, %v273, %v275
    %277 = vrot.lane.b32.xlu0 %v274, 127
    %v278 = vpop.permute.xlu0 %277
    %279 = vrot.lane.b32.xlu0 %v276, 127
    %v280 = vpop.permute.xlu0 %279
    %281 = vrot.lane.b32.xlu0 %v275, 127
    %v282 = vpop.permute.xlu0 %281
    %v286 = vadd.f32 %v200, %v278
    %v287 = vadd.f32 %v201, %v280
    %v288 = vadd.f32 %v202, %v282
    %s289 = sld [smem:[#allocation2 + $0x2b]]
    %v290 = vstv %s289
    %v291 = vmul.f32 %v290, %v43
    %v292 = vmul.f32 %v290, %v50
    %v293 = vmul.f32 %v290, %v58
    %v297 = vrot.slane %v291, 4
    %v298 = vrot.slane %v292, 4
    %v299 = vsel %vm121, %v297, %v298
    %v300 = vrot.slane %v293, 4
    %v301 = vsel %vm121, %v298, %v300
    %302 = vrot.lane.b32.xlu0 %v299, 127
    %v303 = vpop.permute.xlu0 %302
    %304 = vrot.lane.b32.xlu0 %v301, 127
    %v305 = vpop.permute.xlu0 %304
    %306 = vrot.lane.b32.xlu0 %v300, 127
    %v307 = vpop.permute.xlu0 %306
    %v311 = vadd.f32 %v220, %v303
    %v312 = vadd.f32 %v221, %v305
    %v313 = vadd.f32 %v222, %v307
    %s314 = sld [smem:[#allocation2 + $0x2]]
    %v315 = vstv %s314
    %v316 = vmul.f32 %v315, %v43
    %v317 = vmul.f32 %v315, %v50
    %320 = vrot.lane.b32.xlu0 %v316, 126
    %v321 = vpop.permute.xlu0 %320
    %322 = vrot.lane.b32.xlu0 %v317, 126
    %v323 = vpop.permute.xlu0 %322
    %v326 = vadd.f32 %v262, %v321
    %v327 = vadd.f32 %v263, %v323
    %s328 = sld [smem:[#allocation2 + $0x9]]
    %v329 = vstv %s328
    %v330 = vmul.f32 %v329, %v43
    %v331 = vmul.f32 %v329, %v50
    %v332 = vmul.f32 %v329, %v58
    %336 = vrot.lane.b32.xlu0 %v330, 126
    %v337 = vpop.permute.xlu0 %336
    %338 = vrot.lane.b32.xlu0 %v331, 126
    %v339 = vpop.permute.xlu0 %338
    %340 = vrot.lane.b32.xlu0 %v332, 126
    %v341 = vpop.permute.xlu0 %340
    %v345 = vadd.f32 %v286, %v337
    %v346 = vadd.f32 %v287, %v339
    %v347 = vadd.f32 %v288, %v341
    %s348 = sld [smem:[#allocation2 + $0x10]]
    %v349 = vstv %s348
    %v350 = vmul.f32 %v349, %v43
    %v351 = vmul.f32 %v349, %v50
    %v352 = vmul.f32 %v349, %v58
    %356 = vrot.lane.b32.xlu0 %v350, 126
    %v357 = vpop.permute.xlu0 %356
    %358 = vrot.lane.b32.xlu0 %v351, 126
    %v359 = vpop.permute.xlu0 %358
    %360 = vrot.lane.b32.xlu0 %v352, 126
    %v361 = vpop.permute.xlu0 %360
    %v365 = vadd.f32 %v311, %v357
    %v366 = vadd.f32 %v312, %v359
    %v367 = vadd.f32 %v313, %v361
    %s368 = sld [smem:[#allocation2 + $0x17]]
    %v369 = vstv %s368
    %v370 = vmul.f32 %v369, %v43
    %v371 = vmul.f32 %v369, %v50
    %v372 = vmul.f32 %v369, %v58
    %376 = vrot.lane.b32.xlu0 %v370, 126
    %v377 = vpop.permute.xlu0 %376
    %378 = vrot.lane.b32.xlu0 %v371, 126
    %v379 = vpop.permute.xlu0 %378
    %380 = vrot.lane.b32.xlu0 %v372, 126
    %v381 = vpop.permute.xlu0 %380
    %v385 = vadd.f32 %v240, %v377
    %v386 = vadd.f32 %v241, %v379
    %v387 = vadd.f32 %v242, %v381
    %s388 = sld [smem:[#allocation2 + $0x1e]]
    %v389 = vstv %s388
    %v390 = vmul.f32 %v389, %v43
    %v391 = vmul.f32 %v389, %v50
    %v392 = vmul.f32 %v389, %v58
    %v396 = vrot.slane %v390, 4
    %v397 = vrot.slane %v391, 4
    %v398 = vsel %vm121, %v396, %v397
    %v399 = vrot.slane %v392, 4
    %v400 = vsel %vm121, %v397, %v399
    %401 = vrot.lane.b32.xlu0 %v398, 126
    %v402 = vpop.permute.xlu0 %401
    %403 = vrot.lane.b32.xlu0 %v400, 126
    %v404 = vpop.permute.xlu0 %403
    %v407 = vadd.f32 %v326, %v402
    %v408 = vadd.f32 %v327, %v404
    %s409 = sld [smem:[#allocation2 + $0x25]]
    %v410 = vstv %s409
    %v411 = vmul.f32 %v410, %v43
    %v412 = vmul.f32 %v410, %v50
    %v413 = vmul.f32 %v410, %v58
    %v417 = vrot.slane %v411, 4
    %v418 = vrot.slane %v412, 4
    %v419 = vsel %vm121, %v417, %v418
    %v420 = vrot.slane %v413, 4
    %v421 = vsel %vm121, %v418, %v420
    %422 = vrot.lane.b32.xlu0 %v419, 126
    %v423 = vpop.permute.xlu0 %422
    %424 = vrot.lane.b32.xlu0 %v421, 126
    %v425 = vpop.permute.xlu0 %424
    %426 = vrot.lane.b32.xlu0 %v420, 126
    %v427 = vpop.permute.xlu0 %426
    %v431 = vadd.f32 %v345, %v423
    %v432 = vadd.f32 %v346, %v425
    %v433 = vadd.f32 %v347, %v427
    %s434 = sld [smem:[#allocation2 + $0x2c]]
    %v435 = vstv %s434
    %v436 = vmul.f32 %v435, %v43
    %v437 = vmul.f32 %v435, %v50
    %v438 = vmul.f32 %v435, %v58
    %v442 = vrot.slane %v436, 4
    %v443 = vrot.slane %v437, 4
    %v444 = vsel %vm121, %v442, %v443
    %v445 = vrot.slane %v438, 4
    %v446 = vsel %vm121, %v443, %v445
    %447 = vrot.lane.b32.xlu0 %v444, 126
    %v448 = vpop.permute.xlu0 %447
    %449 = vrot.lane.b32.xlu0 %v446, 126
    %v450 = vpop.permute.xlu0 %449
    %451 = vrot.lane.b32.xlu0 %v445, 126
    %v452 = vpop.permute.xlu0 %451
    %v456 = vadd.f32 %v365, %v448
    %v457 = vadd.f32 %v366, %v450
    %v458 = vadd.f32 %v367, %v452
    %s459 = sld [smem:[#allocation2 + $0x3]]
    %v460 = vstv %s459
    %v461 = vmul.f32 %v460, %v43
    %v462 = vmul.f32 %v460, %v50
    %465 = vrot.lane.b32.xlu0 %v461, 125
    %v466 = vpop.permute.xlu0 %465
    %467 = vrot.lane.b32.xlu0 %v462, 125
    %v468 = vpop.permute.xlu0 %467
    %v471 = vadd.f32 %v407, %v466
    %v472 = vadd.f32 %v408, %v468
    %s473 = sld [smem:[#allocation2 + $0xa]]
    %v474 = vstv %s473
    %v475 = vmul.f32 %v474, %v43
    %v476 = vmul.f32 %v474, %v50
    %v477 = vmul.f32 %v474, %v58
    %481 = vrot.lane.b32.xlu0 %v475, 125
    %v482 = vpop.permute.xlu0 %481
    %483 = vrot.lane.b32.xlu0 %v476, 125
    %v484 = vpop.permute.xlu0 %483
    %485 = vrot.lane.b32.xlu0 %v477, 125
    %v486 = vpop.permute.xlu0 %485
    %v490 = vadd.f32 %v431, %v482
    %v491 = vadd.f32 %v432, %v484
    %v492 = vadd.f32 %v433, %v486
    %s493 = sld [smem:[#allocation2 + $0x11]]
    %v494 = vstv %s493
    %v495 = vmul.f32 %v494, %v43
    %v496 = vmul.f32 %v494, %v50
    %v497 = vmul.f32 %v494, %v58
    %501 = vrot.lane.b32.xlu0 %v495, 125
    %v502 = vpop.permute.xlu0 %501
    %503 = vrot.lane.b32.xlu0 %v496, 125
    %v504 = vpop.permute.xlu0 %503
    %505 = vrot.lane.b32.xlu0 %v497, 125
    %v506 = vpop.permute.xlu0 %505
    %v510 = vadd.f32 %v456, %v502
    %v511 = vadd.f32 %v457, %v504
    %v512 = vadd.f32 %v458, %v506
    %s513 = sld [smem:[#allocation2 + $0x18]]
    %v514 = vstv %s513
    %v515 = vmul.f32 %v514, %v43
    %v516 = vmul.f32 %v514, %v50
    %v517 = vmul.f32 %v514, %v58
    %521 = vrot.lane.b32.xlu0 %v515, 125
    %v522 = vpop.permute.xlu0 %521
    %523 = vrot.lane.b32.xlu0 %v516, 125
    %v524 = vpop.permute.xlu0 %523
    %525 = vrot.lane.b32.xlu0 %v517, 125
    %v526 = vpop.permute.xlu0 %525
    %v530 = vadd.f32 %v385, %v522
    %v531 = vadd.f32 %v386, %v524
    %v532 = vadd.f32 %v387, %v526
    %s533 = sld [smem:[#allocation2 + $0x1f]]
    %v534 = vstv %s533
    %v535 = vmul.f32 %v534, %v43
    %v536 = vmul.f32 %v534, %v50
    %v537 = vmul.f32 %v534, %v58
    %v541 = vrot.slane %v535, 4
    %v542 = vrot.slane %v536, 4
    %v543 = vsel %vm121, %v541, %v542
    %v544 = vrot.slane %v537, 4
    %v545 = vsel %vm121, %v542, %v544
    %546 = vrot.lane.b32.xlu0 %v543, 125
    %v547 = vpop.permute.xlu0 %546
    %548 = vrot.lane.b32.xlu0 %v545, 125
    %v549 = vpop.permute.xlu0 %548
    %v552 = vadd.f32 %v471, %v547
    %v553 = vadd.f32 %v472, %v549
    %s554 = sld [smem:[#allocation2 + $0x26]]
    %v555 = vstv %s554
    %v556 = vmul.f32 %v555, %v43
    %v557 = vmul.f32 %v555, %v50
    %v558 = vmul.f32 %v555, %v58
    %v562 = vrot.slane %v556, 4
    %v563 = vrot.slane %v557, 4
    %v564 = vsel %vm121, %v562, %v563
    %v565 = vrot.slane %v558, 4
    %v566 = vsel %vm121, %v563, %v565
    %567 = vrot.lane.b32.xlu0 %v564, 125
    %v568 = vpop.permute.xlu0 %567
    %569 = vrot.lane.b32.xlu0 %v566, 125
    %v570 = vpop.permute.xlu0 %569
    %571 = vrot.lane.b32.xlu0 %v565, 125
    %v572 = vpop.permute.xlu0 %571
    %v576 = vadd.f32 %v490, %v568
    %v577 = vadd.f32 %v491, %v570
    %v578 = vadd.f32 %v492, %v572
    %s579 = sld [smem:[#allocation2 + $0x2d]]
    %v580 = vstv %s579
    %v581 = vmul.f32 %v580, %v43
    %v582 = vmul.f32 %v580, %v50
    %v583 = vmul.f32 %v580, %v58
    %v587 = vrot.slane %v581, 4
    %v588 = vrot.slane %v582, 4
    %v589 = vsel %vm121, %v587, %v588
    %v590 = vrot.slane %v583, 4
    %v591 = vsel %vm121, %v588, %v590
    %592 = vrot.lane.b32.xlu0 %v589, 125
    %v593 = vpop.permute.xlu0 %592
    %594 = vrot.lane.b32.xlu0 %v591, 125
    %v595 = vpop.permute.xlu0 %594
    %596 = vrot.lane.b32.xlu0 %v590, 125
    %v597 = vpop.permute.xlu0 %596
    %v601 = vadd.f32 %v510, %v593
    %v602 = vadd.f32 %v511, %v595
    %v603 = vadd.f32 %v512, %v597
    %s604 = sld [smem:[#allocation2 + $0x4]]
    %v605 = vstv %s604
    %v606 = vmul.f32 %v605, %v43
    %v607 = vmul.f32 %v605, %v50
    %610 = vrot.lane.b32.xlu0 %v606, 124
    %v611 = vpop.permute.xlu0 %610
    %612 = vrot.lane.b32.xlu0 %v607, 124
    %v613 = vpop.permute.xlu0 %612
    %v616 = vadd.f32 %v552, %v611
    %v617 = vadd.f32 %v553, %v613
    %s618 = sld [smem:[#allocation2 + $0xb]]
    %v619 = vstv %s618
    %v620 = vmul.f32 %v619, %v43
    %v621 = vmul.f32 %v619, %v50
    %v622 = vmul.f32 %v619, %v58
    %626 = vrot.lane.b32.xlu0 %v620, 124
    %v627 = vpop.permute.xlu0 %626
    %628 = vrot.lane.b32.xlu0 %v621, 124
    %v629 = vpop.permute.xlu0 %628
    %630 = vrot.lane.b32.xlu0 %v622, 124
    %v631 = vpop.permute.xlu0 %630
    %v635 = vadd.f32 %v576, %v627
    %v636 = vadd.f32 %v577, %v629
    %v637 = vadd.f32 %v578, %v631
    %s638 = sld [smem:[#allocation2 + $0x12]]
    %v639 = vstv %s638
    %v640 = vmul.f32 %v639, %v43
    %v641 = vmul.f32 %v639, %v50
    %v642 = vmul.f32 %v639, %v58
    %646 = vrot.lane.b32.xlu0 %v640, 124
    %v647 = vpop.permute.xlu0 %646
    %648 = vrot.lane.b32.xlu0 %v641, 124
    %v649 = vpop.permute.xlu0 %648
    %650 = vrot.lane.b32.xlu0 %v642, 124
    %v651 = vpop.permute.xlu0 %650
    %v655 = vadd.f32 %v601, %v647
    %v656 = vadd.f32 %v602, %v649
    %v657 = vadd.f32 %v603, %v651
    %s658 = sld [smem:[#allocation2 + $0x19]]
    %v659 = vstv %s658
    %v660 = vmul.f32 %v659, %v43
    %v661 = vmul.f32 %v659, %v50
    %v662 = vmul.f32 %v659, %v58
    %666 = vrot.lane.b32.xlu0 %v660, 124
    %v667 = vpop.permute.xlu0 %666
    %668 = vrot.lane.b32.xlu0 %v661, 124
    %v669 = vpop.permute.xlu0 %668
    %670 = vrot.lane.b32.xlu0 %v662, 124
    %v671 = vpop.permute.xlu0 %670
    %v675 = vadd.f32 %v530, %v667
    %v676 = vadd.f32 %v531, %v669
    %v677 = vadd.f32 %v532, %v671
    %s678 = sld [smem:[#allocation2 + $0x20]]
    %v679 = vstv %s678
    %v680 = vmul.f32 %v679, %v43
    %v681 = vmul.f32 %v679, %v50
    %v682 = vmul.f32 %v679, %v58
    %v686 = vrot.slane %v680, 4
    %v687 = vrot.slane %v681, 4
    %v688 = vsel %vm121, %v686, %v687
    %v689 = vrot.slane %v682, 4
    %v690 = vsel %vm121, %v687, %v689
    %691 = vrot.lane.b32.xlu0 %v688, 124
    %v692 = vpop.permute.xlu0 %691
    %693 = vrot.lane.b32.xlu0 %v690, 124
    %v694 = vpop.permute.xlu0 %693
    %v697 = vadd.f32 %v616, %v692
    %v698 = vadd.f32 %v617, %v694
    %s699 = sld [smem:[#allocation2 + $0x27]]
    %v700 = vstv %s699
    %v701 = vmul.f32 %v700, %v43
    %v702 = vmul.f32 %v700, %v50
    %v703 = vmul.f32 %v700, %v58
    %v707 = vrot.slane %v701, 4
    %v708 = vrot.slane %v702, 4
    %v709 = vsel %vm121, %v707, %v708
    %v710 = vrot.slane %v703, 4
    %v711 = vsel %vm121, %v708, %v710
    %712 = vrot.lane.b32.xlu0 %v709, 124
    %v713 = vpop.permute.xlu0 %712
    %714 = vrot.lane.b32.xlu0 %v711, 124
    %v715 = vpop.permute.xlu0 %714
    %716 = vrot.lane.b32.xlu0 %v710, 124
    %v717 = vpop.permute.xlu0 %716
    %v721 = vadd.f32 %v635, %v713
    %v722 = vadd.f32 %v636, %v715
    %v723 = vadd.f32 %v637, %v717
    %s724 = sld [smem:[#allocation2 + $0x2e]]
    %v725 = vstv %s724
    %v726 = vmul.f32 %v725, %v43
    %v727 = vmul.f32 %v725, %v50
    %v728 = vmul.f32 %v725, %v58
    %v732 = vrot.slane %v726, 4
    %v733 = vrot.slane %v727, 4
    %v734 = vsel %vm121, %v732, %v733
    %v735 = vrot.slane %v728, 4
    %v736 = vsel %vm121, %v733, %v735
    %737 = vrot.lane.b32.xlu0 %v734, 124
    %v738 = vpop.permute.xlu0 %737
    %739 = vrot.lane.b32.xlu0 %v736, 124
    %v740 = vpop.permute.xlu0 %739
    %741 = vrot.lane.b32.xlu0 %v735, 124
    %v742 = vpop.permute.xlu0 %741
    %v746 = vadd.f32 %v655, %v738
    %v747 = vadd.f32 %v656, %v740
    %v748 = vadd.f32 %v657, %v742
    %s749 = sld [smem:[#allocation2 + $0x5]]
    %v750 = vstv %s749
    %v751 = vmul.f32 %v750, %v43
    %v752 = vmul.f32 %v750, %v50
    %755 = vrot.lane.b32.xlu0 %v751, 123
    %v756 = vpop.permute.xlu0 %755
    %757 = vrot.lane.b32.xlu0 %v752, 123
    %v758 = vpop.permute.xlu0 %757
    %v761 = vadd.f32 %v697, %v756
    %v762 = vadd.f32 %v698, %v758
    %s763 = sld [smem:[#allocation2 + $0xc]]
    %v764 = vstv %s763
    %v765 = vmul.f32 %v764, %v43
    %v766 = vmul.f32 %v764, %v50
    %v767 = vmul.f32 %v764, %v58
    %771 = vrot.lane.b32.xlu0 %v765, 123
    %v772 = vpop.permute.xlu0 %771
    %773 = vrot.lane.b32.xlu0 %v766, 123
    %v774 = vpop.permute.xlu0 %773
    %775 = vrot.lane.b32.xlu0 %v767, 123
    %v776 = vpop.permute.xlu0 %775
    %v780 = vadd.f32 %v721, %v772
    %v781 = vadd.f32 %v722, %v774
    %v782 = vadd.f32 %v723, %v776
    %s783 = sld [smem:[#allocation2 + $0x13]]
    %v784 = vstv %s783
    %v785 = vmul.f32 %v784, %v43
    %v786 = vmul.f32 %v784, %v50
    %v787 = vmul.f32 %v784, %v58
    %791 = vrot.lane.b32.xlu0 %v785, 123
    %v792 = vpop.permute.xlu0 %791
    %793 = vrot.lane.b32.xlu0 %v786, 123
    %v794 = vpop.permute.xlu0 %793
    %795 = vrot.lane.b32.xlu0 %v787, 123
    %v796 = vpop.permute.xlu0 %795
    %v800 = vadd.f32 %v746, %v792
    %v801 = vadd.f32 %v747, %v794
    %v802 = vadd.f32 %v748, %v796
    %s803 = sld [smem:[#allocation2 + $0x1a]]
    %v804 = vstv %s803
    %v805 = vmul.f32 %v804, %v43
    %v806 = vmul.f32 %v804, %v50
    %v807 = vmul.f32 %v804, %v58
    %811 = vrot.lane.b32.xlu0 %v805, 123
    %v812 = vpop.permute.xlu0 %811
    %813 = vrot.lane.b32.xlu0 %v806, 123
    %v814 = vpop.permute.xlu0 %813
    %815 = vrot.lane.b32.xlu0 %v807, 123
    %v816 = vpop.permute.xlu0 %815
    %v820 = vadd.f32 %v675, %v812
    %v821 = vadd.f32 %v676, %v814
    %v822 = vadd.f32 %v677, %v816
    %s823 = sld [smem:[#allocation2 + $0x21]]
    %v824 = vstv %s823
    %v825 = vmul.f32 %v824, %v43
    %v826 = vmul.f32 %v824, %v50
    %v827 = vmul.f32 %v824, %v58
    %v831 = vrot.slane %v825, 4
    %v832 = vrot.slane %v826, 4
    %v833 = vsel %vm121, %v831, %v832
    %v834 = vrot.slane %v827, 4
    %v835 = vsel %vm121, %v832, %v834
    %836 = vrot.lane.b32.xlu0 %v833, 123
    %v837 = vpop.permute.xlu0 %836
    %838 = vrot.lane.b32.xlu0 %v835, 123
    %v839 = vpop.permute.xlu0 %838
    %v842 = vadd.f32 %v761, %v837
    %v843 = vadd.f32 %v762, %v839
    %s844 = sld [smem:[#allocation2 + $0x28]]
    %v845 = vstv %s844
    %v846 = vmul.f32 %v845, %v43
    %v847 = vmul.f32 %v845, %v50
    %v848 = vmul.f32 %v845, %v58
    %v852 = vrot.slane %v846, 4
    %v853 = vrot.slane %v847, 4
    %v854 = vsel %vm121, %v852, %v853
    %v855 = vrot.slane %v848, 4
    %v856 = vsel %vm121, %v853, %v855
    %857 = vrot.lane.b32.xlu0 %v854, 123
    %v858 = vpop.permute.xlu0 %857
    %859 = vrot.lane.b32.xlu0 %v856, 123
    %v860 = vpop.permute.xlu0 %859
    %861 = vrot.lane.b32.xlu0 %v855, 123
    %v862 = vpop.permute.xlu0 %861
    %v866 = vadd.f32 %v780, %v858
    %v867 = vadd.f32 %v781, %v860
    %v868 = vadd.f32 %v782, %v862
    %s869 = sld [smem:[#allocation2 + $0x2f]]
    %v870 = vstv %s869
    %v871 = vmul.f32 %v870, %v43
    %v872 = vmul.f32 %v870, %v50
    %v873 = vmul.f32 %v870, %v58
    %v877 = vrot.slane %v871, 4
    %v878 = vrot.slane %v872, 4
    %v879 = vsel %vm121, %v877, %v878
    %v880 = vrot.slane %v873, 4
    %v881 = vsel %vm121, %v878, %v880
    %882 = vrot.lane.b32.xlu0 %v879, 123
    %v883 = vpop.permute.xlu0 %882
    %884 = vrot.lane.b32.xlu0 %v881, 123
    %v885 = vpop.permute.xlu0 %884
    %886 = vrot.lane.b32.xlu0 %v880, 123
    %v887 = vpop.permute.xlu0 %886
    %v891 = vadd.f32 %v800, %v883
    %v892 = vadd.f32 %v801, %v885
    %v893 = vadd.f32 %v802, %v887
    %s894 = sld [smem:[#allocation2 + $0x6]]
    %v895 = vstv %s894
    %v896 = vmul.f32 %v895, %v43
    %v897 = vmul.f32 %v895, %v50
    %900 = vrot.lane.b32.xlu0 %v896, 122
    %v901 = vpop.permute.xlu0 %900
    %902 = vrot.lane.b32.xlu0 %v897, 122
    %v903 = vpop.permute.xlu0 %902
    %v906 = vadd.f32 %v842, %v901
    %v907 = vadd.f32 %v843, %v903
    %s908 = sld [smem:[#allocation2 + $0xd]]
    %v909 = vstv %s908
    %v910 = vmul.f32 %v909, %v43
    %v911 = vmul.f32 %v909, %v50
    %v912 = vmul.f32 %v909, %v58
    %916 = vrot.lane.b32.xlu0 %v910, 122
    %v917 = vpop.permute.xlu0 %916
    %918 = vrot.lane.b32.xlu0 %v911, 122
    %v919 = vpop.permute.xlu0 %918
    %920 = vrot.lane.b32.xlu0 %v912, 122
    %v921 = vpop.permute.xlu0 %920
    %v925 = vadd.f32 %v866, %v917
    %v926 = vadd.f32 %v867, %v919
    %v927 = vadd.f32 %v868, %v921
    %s928 = sld [smem:[#allocation2 + $0x14]]
    %v929 = vstv %s928
    %v930 = vmul.f32 %v929, %v43
    %v931 = vmul.f32 %v929, %v50
    %v932 = vmul.f32 %v929, %v58
    %936 = vrot.lane.b32.xlu0 %v930, 122
    %v937 = vpop.permute.xlu0 %936
    %938 = vrot.lane.b32.xlu0 %v931, 122
    %v939 = vpop.permute.xlu0 %938
    %940 = vrot.lane.b32.xlu0 %v932, 122
    %v941 = vpop.permute.xlu0 %940
    %v945 = vadd.f32 %v891, %v937
    %v946 = vadd.f32 %v892, %v939
    %v947 = vadd.f32 %v893, %v941
    %s948 = sld [smem:[#allocation2 + $0x1b]]
    %v949 = vstv %s948
    %v950 = vmul.f32 %v949, %v43
    %v951 = vmul.f32 %v949, %v50
    %v952 = vmul.f32 %v949, %v58
    %956 = vrot.lane.b32.xlu0 %v950, 122
    %v957 = vpop.permute.xlu0 %956
    %958 = vrot.lane.b32.xlu0 %v951, 122
    %v959 = vpop.permute.xlu0 %958
    %960 = vrot.lane.b32.xlu0 %v952, 122
    %v961 = vpop.permute.xlu0 %960
    %v965 = vadd.f32 %v820, %v957
    %v966 = vadd.f32 %v821, %v959
    %v967 = vadd.f32 %v822, %v961
    %s968 = sld [smem:[#allocation2 + $0x22]]
    %v969 = vstv %s968
    %v970 = vmul.f32 %v969, %v43
    %v971 = vmul.f32 %v969, %v50
    %v972 = vmul.f32 %v969, %v58
    %v976 = vrot.slane %v970, 4
    %v977 = vrot.slane %v971, 4
    %v978 = vsel %vm121, %v976, %v977
    %v979 = vrot.slane %v972, 4
    %v980 = vsel %vm121, %v977, %v979
    %981 = vrot.lane.b32.xlu0 %v978, 122
    %v982 = vpop.permute.xlu0 %981
    %983 = vrot.lane.b32.xlu0 %v980, 122
    %v984 = vpop.permute.xlu0 %983
    %v987 = vadd.f32 %v906, %v982
    %v988 = vadd.f32 %v907, %v984
    %s989 = sld [smem:[#allocation2 + $0x29]]
    %v990 = vstv %s989
    %v991 = vmul.f32 %v990, %v43
    %v992 = vmul.f32 %v990, %v50
    %v993 = vmul.f32 %v990, %v58
    %v997 = vrot.slane %v991, 4
    %v998 = vrot.slane %v992, 4
    %v999 = vsel %vm121, %v997, %v998
    %v1000 = vrot.slane %v993, 4
    %v1001 = vsel %vm121, %v998, %v1000
    %1002 = vrot.lane.b32.xlu0 %v999, 122
    %v1003 = vpop.permute.xlu0 %1002
    %1004 = vrot.lane.b32.xlu0 %v1001, 122
    %v1005 = vpop.permute.xlu0 %1004
    %1006 = vrot.lane.b32.xlu0 %v1000, 122
    %v1007 = vpop.permute.xlu0 %1006
    %v1011 = vadd.f32 %v925, %v1003
    %v1012 = vadd.f32 %v926, %v1005
    %v1013 = vadd.f32 %v927, %v1007
    %s1014 = sld [smem:[#allocation2 + $0x30]]
    %v1015 = vstv %s1014
    %v1016 = vmul.f32 %v1015, %v43
    %v1017 = vmul.f32 %v1015, %v50
    %v1018 = vmul.f32 %v1015, %v58
    %v1022 = vrot.slane %v1016, 4
    %v1023 = vrot.slane %v1017, 4
    %v1024 = vsel %vm121, %v1022, %v1023
    %v1025 = vrot.slane %v1018, 4
    %v1026 = vsel %vm121, %v1023, %v1025
    %1027 = vrot.lane.b32.xlu0 %v1024, 122
    %v1028 = vpop.permute.xlu0 %1027
    %1029 = vrot.lane.b32.xlu0 %v1026, 122
    %v1030 = vpop.permute.xlu0 %1029
    %1031 = vrot.lane.b32.xlu0 %v1025, 122
    %v1032 = vpop.permute.xlu0 %1031
    %v1036 = vadd.f32 %v945, %v1028
    %v1037 = vadd.f32 %v946, %v1030
    %v1038 = vadd.f32 %v947, %v1032
    %s1039 = sld [smem:[#allocation2 + $0x31]]
    %v1040 = vstv %s1039
    %v1041 = vmul.f32 %v1040, %v80
    %v1042 = vmul.f32 %v1040, %v81
    %v1043 = vadd.f32 %v987, %v1041
    %v1044 = vadd.f32 %v988, %v1042
    %s1045 = sld [smem:[#allocation2 + $0x38]]
    %v1046 = vstv %s1045
    %v1047 = vmul.f32 %v1046, %v80
    %v1048 = vmul.f32 %v1046, %v81
    %v1049 = vmul.f32 %v1046, %v82
    %v1050 = vadd.f32 %v1011, %v1047
    %v1051 = vadd.f32 %v1012, %v1048
    %v1052 = vadd.f32 %v1013, %v1049
    %s1053 = sld [smem:[#allocation2 + $0x3f]]
    %v1054 = vstv %s1053
    %v1055 = vmul.f32 %v1054, %v80
    %v1056 = vmul.f32 %v1054, %v81
    %v1057 = vmul.f32 %v1054, %v82
    %v1058 = vadd.f32 %v1036, %v1055
    %v1059 = vadd.f32 %v1037, %v1056
    %v1060 = vadd.f32 %v1038, %v1057
    %s1061 = sld [smem:[#allocation2 + $0x46]]
    %v1062 = vstv %s1061
    %v1063 = vmul.f32 %v1062, %v80
    %v1064 = vmul.f32 %v1062, %v81
    %v1065 = vmul.f32 %v1062, %v82
    %v1066 = vadd.f32 %v965, %v1063
    %v1067 = vadd.f32 %v966, %v1064
    %v1068 = vadd.f32 %v967, %v1065
    %s1069 = sld [smem:[#allocation2 + $0x4d]]
    %v1070 = vstv %s1069
    %v1071 = vmul.f32 %v1070, %v80
    %v1072 = vmul.f32 %v1070, %v81
    %v1073 = vmul.f32 %v1070, %v82
    %v1077 = vrot.slane %v1071, 4
    %v1078 = vrot.slane %v1072, 4
    %v1079 = vsel %vm121, %v1077, %v1078
    %v1080 = vrot.slane %v1073, 4
    %v1081 = vsel %vm121, %v1078, %v1080
    %v1084 = vadd.f32 %v1043, %v1079
    %v1085 = vadd.f32 %v1044, %v1081
    %s1086 = sld [smem:[#allocation2 + $0x54]]
    %v1087 = vstv %s1086
    %v1088 = vmul.f32 %v1087, %v80
    %v1089 = vmul.f32 %v1087, %v81
    %v1090 = vmul.f32 %v1087, %v82
    %v1094 = vrot.slane %v1088, 4
    %v1095 = vrot.slane %v1089, 4
    %v1096 = vsel %vm121, %v1094, %v1095
    %v1097 = vrot.slane %v1090, 4
    %v1098 = vsel %vm121, %v1095, %v1097
    %v1102 = vadd.f32 %v1050, %v1096
    %v1103 = vadd.f32 %v1051, %v1098
    %v1104 = vadd.f32 %v1052, %v1097
    %s1105 = sld [smem:[#allocation2 + $0x5b]]
    %v1106 = vstv %s1105
    %v1107 = vmul.f32 %v1106, %v80
    %v1108 = vmul.f32 %v1106, %v81
    %v1109 = vmul.f32 %v1106, %v82
    %v1113 = vrot.slane %v1107, 4
    %v1114 = vrot.slane %v1108, 4
    %v1115 = vsel %vm121, %v1113, %v1114
    %v1116 = vrot.slane %v1109, 4
    %v1117 = vsel %vm121, %v1114, %v1116
    %v1121 = vadd.f32 %v1058, %v1115
    %v1122 = vadd.f32 %v1059, %v1117
    %v1123 = vadd.f32 %v1060, %v1116
    %s1124 = sld [smem:[#allocation2 + $0x32]]
    %v1125 = vstv %s1124
    %v1126 = vmul.f32 %v1125, %v80
    %v1127 = vmul.f32 %v1125, %v81
    %1130 = vrot.lane.b32.xlu0 %v1126, 127
    %v1131 = vpop.permute.xlu0 %1130
    %1132 = vrot.lane.b32.xlu0 %v1127, 127
    %v1133 = vpop.permute.xlu0 %1132
    %v1136 = vadd.f32 %v1084, %v1131
    %v1137 = vadd.f32 %v1085, %v1133
    %s1138 = sld [smem:[#allocation2 + $0x39]]
    %v1139 = vstv %s1138
    %v1140 = vmul.f32 %v1139, %v80
    %v1141 = vmul.f32 %v1139, %v81
    %v1142 = vmul.f32 %v1139, %v82
    %1146 = vrot.lane.b32.xlu0 %v1140, 127
    %v1147 = vpop.permute.xlu0 %1146
    %1148 = vrot.lane.b32.xlu0 %v1141, 127
    %v1149 = vpop.permute.xlu0 %1148
    %1150 = vrot.lane.b32.xlu0 %v1142, 127
    %v1151 = vpop.permute.xlu0 %1150
    %v1155 = vadd.f32 %v1102, %v1147
    %v1156 = vadd.f32 %v1103, %v1149
    %v1157 = vadd.f32 %v1104, %v1151
    %s1158 = sld [smem:[#allocation2 + $0x40]]
    %v1159 = vstv %s1158
    %v1160 = vmul.f32 %v1159, %v80
    %v1161 = vmul.f32 %v1159, %v81
    %v1162 = vmul.f32 %v1159, %v82
    %1166 = vrot.lane.b32.xlu0 %v1160, 127
    %v1167 = vpop.permute.xlu0 %1166
    %1168 = vrot.lane.b32.xlu0 %v1161, 127
    %v1169 = vpop.permute.xlu0 %1168
    %1170 = vrot.lane.b32.xlu0 %v1162, 127
    %v1171 = vpop.permute.xlu0 %1170
    %v1175 = vadd.f32 %v1121, %v1167
    %v1176 = vadd.f32 %v1122, %v1169
    %v1177 = vadd.f32 %v1123, %v1171
    %s1178 = sld [smem:[#allocation2 + $0x47]]
    %v1179 = vstv %s1178
    %v1180 = vmul.f32 %v1179, %v80
    %v1181 = vmul.f32 %v1179, %v81
    %v1182 = vmul.f32 %v1179, %v82
    %1186 = vrot.lane.b32.xlu0 %v1180, 127
    %v1187 = vpop.permute.xlu0 %1186
    %1188 = vrot.lane.b32.xlu0 %v1181, 127
    %v1189 = vpop.permute.xlu0 %1188
    %1190 = vrot.lane.b32.xlu0 %v1182, 127
    %v1191 = vpop.permute.xlu0 %1190
    %v1195 = vadd.f32 %v1066, %v1187
    %v1196 = vadd.f32 %v1067, %v1189
    %v1197 = vadd.f32 %v1068, %v1191
    %s1198 = sld [smem:[#allocation2 + $0x4e]]
    %v1199 = vstv %s1198
    %v1200 = vmul.f32 %v1199, %v80
    %v1201 = vmul.f32 %v1199, %v81
    %v1202 = vmul.f32 %v1199, %v82
    %v1206 = vrot.slane %v1200, 4
    %v1207 = vrot.slane %v1201, 4
    %v1208 = vsel %vm121, %v1206, %v1207
    %v1209 = vrot.slane %v1202, 4
    %v1210 = vsel %vm121, %v1207, %v1209
    %1211 = vrot.lane.b32.xlu0 %v1208, 127
    %v1212 = vpop.permute.xlu0 %1211
    %1213 = vrot.lane.b32.xlu0 %v1210, 127
    %v1214 = vpop.permute.xlu0 %1213
    %v1217 = vadd.f32 %v1136, %v1212
    %v1218 = vadd.f32 %v1137, %v1214
    %s1219 = sld [smem:[#allocation2 + $0x55]]
    %v1220 = vstv %s1219
    %v1221 = vmul.f32 %v1220, %v80
    %v1222 = vmul.f32 %v1220, %v81
    %v1223 = vmul.f32 %v1220, %v82
    %v1227 = vrot.slane %v1221, 4
    %v1228 = vrot.slane %v1222, 4
    %v1229 = vsel %vm121, %v1227, %v1228
    %v1230 = vrot.slane %v1223, 4
    %v1231 = vsel %vm121, %v1228, %v1230
    %1232 = vrot.lane.b32.xlu0 %v1229, 127
    %v1233 = vpop.permute.xlu0 %1232
    %1234 = vrot.lane.b32.xlu0 %v1231, 127
    %v1235 = vpop.permute.xlu0 %1234
    %1236 = vrot.lane.b32.xlu0 %v1230, 127
    %v1237 = vpop.permute.xlu0 %1236
    %v1241 = vadd.f32 %v1155, %v1233
    %v1242 = vadd.f32 %v1156, %v1235
    %v1243 = vadd.f32 %v1157, %v1237
    %s1244 = sld [smem:[#allocation2 + $0x5c]]
    %v1245 = vstv %s1244
    %v1246 = vmul.f32 %v1245, %v80
    %v1247 = vmul.f32 %v1245, %v81
    %v1248 = vmul.f32 %v1245, %v82
    %v1252 = vrot.slane %v1246, 4
    %v1253 = vrot.slane %v1247, 4
    %v1254 = vsel %vm121, %v1252, %v1253
    %v1255 = vrot.slane %v1248, 4
    %v1256 = vsel %vm121, %v1253, %v1255
    %1257 = vrot.lane.b32.xlu0 %v1254, 127
    %v1258 = vpop.permute.xlu0 %1257
    %1259 = vrot.lane.b32.xlu0 %v1256, 127
    %v1260 = vpop.permute.xlu0 %1259
    %1261 = vrot.lane.b32.xlu0 %v1255, 127
    %v1262 = vpop.permute.xlu0 %1261
    %v1266 = vadd.f32 %v1175, %v1258
    %v1267 = vadd.f32 %v1176, %v1260
    %v1268 = vadd.f32 %v1177, %v1262
    %s1269 = sld [smem:[#allocation2 + $0x33]]
    %v1270 = vstv %s1269
    %v1271 = vmul.f32 %v1270, %v80
    %v1272 = vmul.f32 %v1270, %v81
    %1275 = vrot.lane.b32.xlu0 %v1271, 126
    %v1276 = vpop.permute.xlu0 %1275
    %1277 = vrot.lane.b32.xlu0 %v1272, 126
    %v1278 = vpop.permute.xlu0 %1277
    %v1281 = vadd.f32 %v1217, %v1276
    %v1282 = vadd.f32 %v1218, %v1278
    %s1283 = sld [smem:[#allocation2 + $0x3a]]
    %v1284 = vstv %s1283
    %v1285 = vmul.f32 %v1284, %v80
    %v1286 = vmul.f32 %v1284, %v81
    %v1287 = vmul.f32 %v1284, %v82
    %1291 = vrot.lane.b32.xlu0 %v1285, 126
    %v1292 = vpop.permute.xlu0 %1291
    %1293 = vrot.lane.b32.xlu0 %v1286, 126
    %v1294 = vpop.permute.xlu0 %1293
    %1295 = vrot.lane.b32.xlu0 %v1287, 126
    %v1296 = vpop.permute.xlu0 %1295
    %v1300 = vadd.f32 %v1241, %v1292
    %v1301 = vadd.f32 %v1242, %v1294
    %v1302 = vadd.f32 %v1243, %v1296
    %s1303 = sld [smem:[#allocation2 + $0x41]]
    %v1304 = vstv %s1303
    %v1305 = vmul.f32 %v1304, %v80
    %v1306 = vmul.f32 %v1304, %v81
    %v1307 = vmul.f32 %v1304, %v82
    %1311 = vrot.lane.b32.xlu0 %v1305, 126
    %v1312 = vpop.permute.xlu0 %1311
    %1313 = vrot.lane.b32.xlu0 %v1306, 126
    %v1314 = vpop.permute.xlu0 %1313
    %1315 = vrot.lane.b32.xlu0 %v1307, 126
    %v1316 = vpop.permute.xlu0 %1315
    %v1320 = vadd.f32 %v1266, %v1312
    %v1321 = vadd.f32 %v1267, %v1314
    %v1322 = vadd.f32 %v1268, %v1316
    %s1323 = sld [smem:[#allocation2 + $0x48]]
    %v1324 = vstv %s1323
    %v1325 = vmul.f32 %v1324, %v80
    %v1326 = vmul.f32 %v1324, %v81
    %v1327 = vmul.f32 %v1324, %v82
    %1331 = vrot.lane.b32.xlu0 %v1325, 126
    %v1332 = vpop.permute.xlu0 %1331
    %1333 = vrot.lane.b32.xlu0 %v1326, 126
    %v1334 = vpop.permute.xlu0 %1333
    %1335 = vrot.lane.b32.xlu0 %v1327, 126
    %v1336 = vpop.permute.xlu0 %1335
    %v1340 = vadd.f32 %v1195, %v1332
    %v1341 = vadd.f32 %v1196, %v1334
    %v1342 = vadd.f32 %v1197, %v1336
    %s1343 = sld [smem:[#allocation2 + $0x4f]]
    %v1344 = vstv %s1343
    %v1345 = vmul.f32 %v1344, %v80
    %v1346 = vmul.f32 %v1344, %v81
    %v1347 = vmul.f32 %v1344, %v82
    %v1351 = vrot.slane %v1345, 4
    %v1352 = vrot.slane %v1346, 4
    %v1353 = vsel %vm121, %v1351, %v1352
    %v1354 = vrot.slane %v1347, 4
    %v1355 = vsel %vm121, %v1352, %v1354
    %1356 = vrot.lane.b32.xlu0 %v1353, 126
    %v1357 = vpop.permute.xlu0 %1356
    %1358 = vrot.lane.b32.xlu0 %v1355, 126
    %v1359 = vpop.permute.xlu0 %1358
    %v1362 = vadd.f32 %v1281, %v1357
    %v1363 = vadd.f32 %v1282, %v1359
    %s1364 = sld [smem:[#allocation2 + $0x56]]
    %v1365 = vstv %s1364
    %v1366 = vmul.f32 %v1365, %v80
    %v1367 = vmul.f32 %v1365, %v81
    %v1368 = vmul.f32 %v1365, %v82
    %v1372 = vrot.slane %v1366, 4
    %v1373 = vrot.slane %v1367, 4
    %v1374 = vsel %vm121, %v1372, %v1373
    %v1375 = vrot.slane %v1368, 4
    %v1376 = vsel %vm121, %v1373, %v1375
    %1377 = vrot.lane.b32.xlu0 %v1374, 126
    %v1378 = vpop.permute.xlu0 %1377
    %1379 = vrot.lane.b32.xlu0 %v1376, 126
    %v1380 = vpop.permute.xlu0 %1379
    %1381 = vrot.lane.b32.xlu0 %v1375, 126
    %v1382 = vpop.permute.xlu0 %1381
    %v1386 = vadd.f32 %v1300, %v1378
    %v1387 = vadd.f32 %v1301, %v1380
    %v1388 = vadd.f32 %v1302, %v1382
    %s1389 = sld [smem:[#allocation2 + $0x5d]]
    %v1390 = vstv %s1389
    %v1391 = vmul.f32 %v1390, %v80
    %v1392 = vmul.f32 %v1390, %v81
    %v1393 = vmul.f32 %v1390, %v82
    %v1397 = vrot.slane %v1391, 4
    %v1398 = vrot.slane %v1392, 4
    %v1399 = vsel %vm121, %v1397, %v1398
    %v1400 = vrot.slane %v1393, 4
    %v1401 = vsel %vm121, %v1398, %v1400
    %1402 = vrot.lane.b32.xlu0 %v1399, 126
    %v1403 = vpop.permute.xlu0 %1402
    %1404 = vrot.lane.b32.xlu0 %v1401, 126
    %v1405 = vpop.permute.xlu0 %1404
    %1406 = vrot.lane.b32.xlu0 %v1400, 126
    %v1407 = vpop.permute.xlu0 %1406
    %v1411 = vadd.f32 %v1320, %v1403
    %v1412 = vadd.f32 %v1321, %v1405
    %v1413 = vadd.f32 %v1322, %v1407
    %s1414 = sld [smem:[#allocation2 + $0x34]]
    %v1415 = vstv %s1414
    %v1416 = vmul.f32 %v1415, %v80
    %v1417 = vmul.f32 %v1415, %v81
    %1420 = vrot.lane.b32.xlu0 %v1416, 125
    %v1421 = vpop.permute.xlu0 %1420
    %1422 = vrot.lane.b32.xlu0 %v1417, 125
    %v1423 = vpop.permute.xlu0 %1422
    %v1426 = vadd.f32 %v1362, %v1421
    %v1427 = vadd.f32 %v1363, %v1423
    %s1428 = sld [smem:[#allocation2 + $0x3b]]
    %v1429 = vstv %s1428
    %v1430 = vmul.f32 %v1429, %v80
    %v1431 = vmul.f32 %v1429, %v81
    %v1432 = vmul.f32 %v1429, %v82
    %1436 = vrot.lane.b32.xlu0 %v1430, 125
    %v1437 = vpop.permute.xlu0 %1436
    %1438 = vrot.lane.b32.xlu0 %v1431, 125
    %v1439 = vpop.permute.xlu0 %1438
    %1440 = vrot.lane.b32.xlu0 %v1432, 125
    %v1441 = vpop.permute.xlu0 %1440
    %v1445 = vadd.f32 %v1386, %v1437
    %v1446 = vadd.f32 %v1387, %v1439
    %v1447 = vadd.f32 %v1388, %v1441
    %s1448 = sld [smem:[#allocation2 + $0x42]]
    %v1449 = vstv %s1448
    %v1450 = vmul.f32 %v1449, %v80
    %v1451 = vmul.f32 %v1449, %v81
    %v1452 = vmul.f32 %v1449, %v82
    %1456 = vrot.lane.b32.xlu0 %v1450, 125
    %v1457 = vpop.permute.xlu0 %1456
    %1458 = vrot.lane.b32.xlu0 %v1451, 125
    %v1459 = vpop.permute.xlu0 %1458
    %1460 = vrot.lane.b32.xlu0 %v1452, 125
    %v1461 = vpop.permute.xlu0 %1460
    %v1465 = vadd.f32 %v1411, %v1457
    %v1466 = vadd.f32 %v1412, %v1459
    %v1467 = vadd.f32 %v1413, %v1461
    %s1468 = sld [smem:[#allocation2 + $0x49]]
    %v1469 = vstv %s1468
    %v1470 = vmul.f32 %v1469, %v80
    %v1471 = vmul.f32 %v1469, %v81
    %v1472 = vmul.f32 %v1469, %v82
    %1476 = vrot.lane.b32.xlu0 %v1470, 125
    %v1477 = vpop.permute.xlu0 %1476
    %1478 = vrot.lane.b32.xlu0 %v1471, 125
    %v1479 = vpop.permute.xlu0 %1478
    %1480 = vrot.lane.b32.xlu0 %v1472, 125
    %v1481 = vpop.permute.xlu0 %1480
    %v1485 = vadd.f32 %v1340, %v1477
    %v1486 = vadd.f32 %v1341, %v1479
    %v1487 = vadd.f32 %v1342, %v1481
    %s1488 = sld [smem:[#allocation2 + $0x50]]
    %v1489 = vstv %s1488
    %v1490 = vmul.f32 %v1489, %v80
    %v1491 = vmul.f32 %v1489, %v81
    %v1492 = vmul.f32 %v1489, %v82
    %v1496 = vrot.slane %v1490, 4
    %v1497 = vrot.slane %v1491, 4
    %v1498 = vsel %vm121, %v1496, %v1497
    %v1499 = vrot.slane %v1492, 4
    %v1500 = vsel %vm121, %v1497, %v1499
    %1501 = vrot.lane.b32.xlu0 %v1498, 125
    %v1502 = vpop.permute.xlu0 %1501
    %1503 = vrot.lane.b32.xlu0 %v1500, 125
    %v1504 = vpop.permute.xlu0 %1503
    %v1507 = vadd.f32 %v1426, %v1502
    %v1508 = vadd.f32 %v1427, %v1504
    %s1509 = sld [smem:[#allocation2 + $0x57]]
    %v1510 = vstv %s1509
    %v1511 = vmul.f32 %v1510, %v80
    %v1512 = vmul.f32 %v1510, %v81
    %v1513 = vmul.f32 %v1510, %v82
    %v1517 = vrot.slane %v1511, 4
    %v1518 = vrot.slane %v1512, 4
    %v1519 = vsel %vm121, %v1517, %v1518
    %v1520 = vrot.slane %v1513, 4
    %v1521 = vsel %vm121, %v1518, %v1520
    %1522 = vrot.lane.b32.xlu0 %v1519, 125
    %v1523 = vpop.permute.xlu0 %1522
    %1524 = vrot.lane.b32.xlu0 %v1521, 125
    %v1525 = vpop.permute.xlu0 %1524
    %1526 = vrot.lane.b32.xlu0 %v1520, 125
    %v1527 = vpop.permute.xlu0 %1526
    %v1531 = vadd.f32 %v1445, %v1523
    %v1532 = vadd.f32 %v1446, %v1525
    %v1533 = vadd.f32 %v1447, %v1527
    %s1534 = sld [smem:[#allocation2 + $0x5e]]
    %v1535 = vstv %s1534
    %v1536 = vmul.f32 %v1535, %v80
    %v1537 = vmul.f32 %v1535, %v81
    %v1538 = vmul.f32 %v1535, %v82
    %v1542 = vrot.slane %v1536, 4
    %v1543 = vrot.slane %v1537, 4
    %v1544 = vsel %vm121, %v1542, %v1543
    %v1545 = vrot.slane %v1538, 4
    %v1546 = vsel %vm121, %v1543, %v1545
    %1547 = vrot.lane.b32.xlu0 %v1544, 125
    %v1548 = vpop.permute.xlu0 %1547
    %1549 = vrot.lane.b32.xlu0 %v1546, 125
    %v1550 = vpop.permute.xlu0 %1549
    %1551 = vrot.lane.b32.xlu0 %v1545, 125
    %v1552 = vpop.permute.xlu0 %1551
    %v1556 = vadd.f32 %v1465, %v1548
    %v1557 = vadd.f32 %v1466, %v1550
    %v1558 = vadd.f32 %v1467, %v1552
    %s1559 = sld [smem:[#allocation2 + $0x35]]
    %v1560 = vstv %s1559
    %v1561 = vmul.f32 %v1560, %v80
    %v1562 = vmul.f32 %v1560, %v81
    %1565 = vrot.lane.b32.xlu0 %v1561, 124
    %v1566 = vpop.permute.xlu0 %1565
    %1567 = vrot.lane.b32.xlu0 %v1562, 124
    %v1568 = vpop.permute.xlu0 %1567
    %v1571 = vadd.f32 %v1507, %v1566
    %v1572 = vadd.f32 %v1508, %v1568
    %s1573 = sld [smem:[#allocation2 + $0x3c]]
    %v1574 = vstv %s1573
    %v1575 = vmul.f32 %v1574, %v80
    %v1576 = vmul.f32 %v1574, %v81
    %v1577 = vmul.f32 %v1574, %v82
    %1581 = vrot.lane.b32.xlu0 %v1575, 124
    %v1582 = vpop.permute.xlu0 %1581
    %1583 = vrot.lane.b32.xlu0 %v1576, 124
    %v1584 = vpop.permute.xlu0 %1583
    %1585 = vrot.lane.b32.xlu0 %v1577, 124
    %v1586 = vpop.permute.xlu0 %1585
    %v1590 = vadd.f32 %v1531, %v1582
    %v1591 = vadd.f32 %v1532, %v1584
    %v1592 = vadd.f32 %v1533, %v1586
    %s1593 = sld [smem:[#allocation2 + $0x43]]
    %v1594 = vstv %s1593
    %v1595 = vmul.f32 %v1594, %v80
    %v1596 = vmul.f32 %v1594, %v81
    %v1597 = vmul.f32 %v1594, %v82
    %1601 = vrot.lane.b32.xlu0 %v1595, 124
    %v1602 = vpop.permute.xlu0 %1601
    %1603 = vrot.lane.b32.xlu0 %v1596, 124
    %v1604 = vpop.permute.xlu0 %1603
    %1605 = vrot.lane.b32.xlu0 %v1597, 124
    %v1606 = vpop.permute.xlu0 %1605
    %v1610 = vadd.f32 %v1556, %v1602
    %v1611 = vadd.f32 %v1557, %v1604
    %v1612 = vadd.f32 %v1558, %v1606
    %s1613 = sld [smem:[#allocation2 + $0x4a]]
    %v1614 = vstv %s1613
    %v1615 = vmul.f32 %v1614, %v80
    %v1616 = vmul.f32 %v1614, %v81
    %v1617 = vmul.f32 %v1614, %v82
    %1621 = vrot.lane.b32.xlu0 %v1615, 124
    %v1622 = vpop.permute.xlu0 %1621
    %1623 = vrot.lane.b32.xlu0 %v1616, 124
    %v1624 = vpop.permute.xlu0 %1623
    %1625 = vrot.lane.b32.xlu0 %v1617, 124
    %v1626 = vpop.permute.xlu0 %1625
    %v1630 = vadd.f32 %v1485, %v1622
    %v1631 = vadd.f32 %v1486, %v1624
    %v1632 = vadd.f32 %v1487, %v1626
    %s1633 = sld [smem:[#allocation2 + $0x51]]
    %v1634 = vstv %s1633
    %v1635 = vmul.f32 %v1634, %v80
    %v1636 = vmul.f32 %v1634, %v81
    %v1637 = vmul.f32 %v1634, %v82
    %v1641 = vrot.slane %v1635, 4
    %v1642 = vrot.slane %v1636, 4
    %v1643 = vsel %vm121, %v1641, %v1642
    %v1644 = vrot.slane %v1637, 4
    %v1645 = vsel %vm121, %v1642, %v1644
    %1646 = vrot.lane.b32.xlu0 %v1643, 124
    %v1647 = vpop.permute.xlu0 %1646
    %1648 = vrot.lane.b32.xlu0 %v1645, 124
    %v1649 = vpop.permute.xlu0 %1648
    %v1652 = vadd.f32 %v1571, %v1647
    %v1653 = vadd.f32 %v1572, %v1649
    %s1654 = sld [smem:[#allocation2 + $0x58]]
    %v1655 = vstv %s1654
    %v1656 = vmul.f32 %v1655, %v80
    %v1657 = vmul.f32 %v1655, %v81
    %v1658 = vmul.f32 %v1655, %v82
    %v1662 = vrot.slane %v1656, 4
    %v1663 = vrot.slane %v1657, 4
    %v1664 = vsel %vm121, %v1662, %v1663
    %v1665 = vrot.slane %v1658, 4
    %v1666 = vsel %vm121, %v1663, %v1665
    %1667 = vrot.lane.b32.xlu0 %v1664, 124
    %v1668 = vpop.permute.xlu0 %1667
    %1669 = vrot.lane.b32.xlu0 %v1666, 124
    %v1670 = vpop.permute.xlu0 %1669
    %1671 = vrot.lane.b32.xlu0 %v1665, 124
    %v1672 = vpop.permute.xlu0 %1671
    %v1676 = vadd.f32 %v1590, %v1668
    %v1677 = vadd.f32 %v1591, %v1670
    %v1678 = vadd.f32 %v1592, %v1672
    %s1679 = sld [smem:[#allocation2 + $0x5f]]
    %v1680 = vstv %s1679
    %v1681 = vmul.f32 %v1680, %v80
    %v1682 = vmul.f32 %v1680, %v81
    %v1683 = vmul.f32 %v1680, %v82
    %v1687 = vrot.slane %v1681, 4
    %v1688 = vrot.slane %v1682, 4
    %v1689 = vsel %vm121, %v1687, %v1688
    %v1690 = vrot.slane %v1683, 4
    %v1691 = vsel %vm121, %v1688, %v1690
    %1692 = vrot.lane.b32.xlu0 %v1689, 124
    %v1693 = vpop.permute.xlu0 %1692
    %1694 = vrot.lane.b32.xlu0 %v1691, 124
    %v1695 = vpop.permute.xlu0 %1694
    %1696 = vrot.lane.b32.xlu0 %v1690, 124
    %v1697 = vpop.permute.xlu0 %1696
    %v1701 = vadd.f32 %v1610, %v1693
    %v1702 = vadd.f32 %v1611, %v1695
    %v1703 = vadd.f32 %v1612, %v1697
    %s1704 = sld [smem:[#allocation2 + $0x36]]
    %v1705 = vstv %s1704
    %v1706 = vmul.f32 %v1705, %v80
    %v1707 = vmul.f32 %v1705, %v81
    %1710 = vrot.lane.b32.xlu0 %v1706, 123
    %v1711 = vpop.permute.xlu0 %1710
    %1712 = vrot.lane.b32.xlu0 %v1707, 123
    %v1713 = vpop.permute.xlu0 %1712
    %v1716 = vadd.f32 %v1652, %v1711
    %v1717 = vadd.f32 %v1653, %v1713
    %s1718 = sld [smem:[#allocation2 + $0x3d]]
    %v1719 = vstv %s1718
    %v1720 = vmul.f32 %v1719, %v80
    %v1721 = vmul.f32 %v1719, %v81
    %v1722 = vmul.f32 %v1719, %v82
    %1726 = vrot.lane.b32.xlu0 %v1720, 123
    %v1727 = vpop.permute.xlu0 %1726
    %1728 = vrot.lane.b32.xlu0 %v1721, 123
    %v1729 = vpop.permute.xlu0 %1728
    %1730 = vrot.lane.b32.xlu0 %v1722, 123
    %v1731 = vpop.permute.xlu0 %1730
    %v1735 = vadd.f32 %v1676, %v1727
    %v1736 = vadd.f32 %v1677, %v1729
    %v1737 = vadd.f32 %v1678, %v1731
    %s1738 = sld [smem:[#allocation2 + $0x44]]
    %v1739 = vstv %s1738
    %v1740 = vmul.f32 %v1739, %v80
    %v1741 = vmul.f32 %v1739, %v81
    %v1742 = vmul.f32 %v1739, %v82
    %1746 = vrot.lane.b32.xlu0 %v1740, 123
    %v1747 = vpop.permute.xlu0 %1746
    %1748 = vrot.lane.b32.xlu0 %v1741, 123
    %v1749 = vpop.permute.xlu0 %1748
    %1750 = vrot.lane.b32.xlu0 %v1742, 123
    %v1751 = vpop.permute.xlu0 %1750
    %v1755 = vadd.f32 %v1701, %v1747
    %v1756 = vadd.f32 %v1702, %v1749
    %v1757 = vadd.f32 %v1703, %v1751
    %s1758 = sld [smem:[#allocation2 + $0x4b]]
    %v1759 = vstv %s1758
    %v1760 = vmul.f32 %v1759, %v80
    %v1761 = vmul.f32 %v1759, %v81
    %v1762 = vmul.f32 %v1759, %v82
    %1766 = vrot.lane.b32.xlu0 %v1760, 123
    %v1767 = vpop.permute.xlu0 %1766
    %1768 = vrot.lane.b32.xlu0 %v1761, 123
    %v1769 = vpop.permute.xlu0 %1768
    %1770 = vrot.lane.b32.xlu0 %v1762, 123
    %v1771 = vpop.permute.xlu0 %1770
    %v1775 = vadd.f32 %v1630, %v1767
    %v1776 = vadd.f32 %v1631, %v1769
    %v1777 = vadd.f32 %v1632, %v1771
    %s1778 = sld [smem:[#allocation2 + $0x52]]
    %v1779 = vstv %s1778
    %v1780 = vmul.f32 %v1779, %v80
    %v1781 = vmul.f32 %v1779, %v81
    %v1782 = vmul.f32 %v1779, %v82
    %v1786 = vrot.slane %v1780, 4
    %v1787 = vrot.slane %v1781, 4
    %v1788 = vsel %vm121, %v1786, %v1787
    %v1789 = vrot.slane %v1782, 4
    %v1790 = vsel %vm121, %v1787, %v1789
    %1791 = vrot.lane.b32.xlu0 %v1788, 123
    %v1792 = vpop.permute.xlu0 %1791
    %1793 = vrot.lane.b32.xlu0 %v1790, 123
    %v1794 = vpop.permute.xlu0 %1793
    %v1797 = vadd.f32 %v1716, %v1792
    %v1798 = vadd.f32 %v1717, %v1794
    %s1799 = sld [smem:[#allocation2 + $0x59]]
    %v1800 = vstv %s1799
    %v1801 = vmul.f32 %v1800, %v80
    %v1802 = vmul.f32 %v1800, %v81
    %v1803 = vmul.f32 %v1800, %v82
    %v1807 = vrot.slane %v1801, 4
    %v1808 = vrot.slane %v1802, 4
    %v1809 = vsel %vm121, %v1807, %v1808
    %v1810 = vrot.slane %v1803, 4
    %v1811 = vsel %vm121, %v1808, %v1810
    %1812 = vrot.lane.b32.xlu0 %v1809, 123
    %v1813 = vpop.permute.xlu0 %1812
    %1814 = vrot.lane.b32.xlu0 %v1811, 123
    %v1815 = vpop.permute.xlu0 %1814
    %1816 = vrot.lane.b32.xlu0 %v1810, 123
    %v1817 = vpop.permute.xlu0 %1816
    %v1821 = vadd.f32 %v1735, %v1813
    %v1822 = vadd.f32 %v1736, %v1815
    %v1823 = vadd.f32 %v1737, %v1817
    %s1824 = sld [smem:[#allocation2 + $0x60]]
    %v1825 = vstv %s1824
    %v1826 = vmul.f32 %v1825, %v80
    %v1827 = vmul.f32 %v1825, %v81
    %v1828 = vmul.f32 %v1825, %v82
    %v1832 = vrot.slane %v1826, 4
    %v1833 = vrot.slane %v1827, 4
    %v1834 = vsel %vm121, %v1832, %v1833
    %v1835 = vrot.slane %v1828, 4
    %v1836 = vsel %vm121, %v1833, %v1835
    %1837 = vrot.lane.b32.xlu0 %v1834, 123
    %v1838 = vpop.permute.xlu0 %1837
    %1839 = vrot.lane.b32.xlu0 %v1836, 123
    %v1840 = vpop.permute.xlu0 %1839
    %1841 = vrot.lane.b32.xlu0 %v1835, 123
    %v1842 = vpop.permute.xlu0 %1841
    %v1846 = vadd.f32 %v1755, %v1838
    %v1847 = vadd.f32 %v1756, %v1840
    %v1848 = vadd.f32 %v1757, %v1842
    %s1849 = sld [smem:[#allocation2 + $0x37]]
    %v1850 = vstv %s1849
    %v1851 = vmul.f32 %v1850, %v80
    %v1852 = vmul.f32 %v1850, %v81
    %1855 = vrot.lane.b32.xlu0 %v1851, 122
    %v1856 = vpop.permute.xlu0 %1855
    %1857 = vrot.lane.b32.xlu0 %v1852, 122
    %v1858 = vpop.permute.xlu0 %1857
    %v1861 = vadd.f32 %v1797, %v1856
    %v1862 = vadd.f32 %v1798, %v1858
    %s1863 = sld [smem:[#allocation2 + $0x3e]]
    %v1864 = vstv %s1863
    %v1865 = vmul.f32 %v1864, %v80
    %v1866 = vmul.f32 %v1864, %v81
    %v1867 = vmul.f32 %v1864, %v82
    %1871 = vrot.lane.b32.xlu0 %v1865, 122
    %v1872 = vpop.permute.xlu0 %1871
    %1873 = vrot.lane.b32.xlu0 %v1866, 122
    %v1874 = vpop.permute.xlu0 %1873
    %1875 = vrot.lane.b32.xlu0 %v1867, 122
    %v1876 = vpop.permute.xlu0 %1875
    %v1880 = vadd.f32 %v1821, %v1872
    %v1881 = vadd.f32 %v1822, %v1874
    %v1882 = vadd.f32 %v1823, %v1876
    %s1883 = sld [smem:[#allocation2 + $0x45]]
    %v1884 = vstv %s1883
    %v1885 = vmul.f32 %v1884, %v80
    %v1886 = vmul.f32 %v1884, %v81
    %v1887 = vmul.f32 %v1884, %v82
    %1891 = vrot.lane.b32.xlu0 %v1885, 122
    %v1892 = vpop.permute.xlu0 %1891
    %1893 = vrot.lane.b32.xlu0 %v1886, 122
    %v1894 = vpop.permute.xlu0 %1893
    %1895 = vrot.lane.b32.xlu0 %v1887, 122
    %v1896 = vpop.permute.xlu0 %1895
    %v1900 = vadd.f32 %v1846, %v1892
    %v1901 = vadd.f32 %v1847, %v1894
    %v1902 = vadd.f32 %v1848, %v1896
    %s1903 = sld [smem:[#allocation2 + $0x4c]]
    %v1904 = vstv %s1903
    %v1905 = vmul.f32 %v1904, %v80
    %v1906 = vmul.f32 %v1904, %v81
    %v1907 = vmul.f32 %v1904, %v82
    %1911 = vrot.lane.b32.xlu0 %v1905, 122
    %v1912 = vpop.permute.xlu0 %1911
    %1913 = vrot.lane.b32.xlu0 %v1906, 122
    %v1914 = vpop.permute.xlu0 %1913
    %1915 = vrot.lane.b32.xlu0 %v1907, 122
    %v1916 = vpop.permute.xlu0 %1915
    %v1920 = vadd.f32 %v1775, %v1912
    %v1921 = vadd.f32 %v1776, %v1914
    %v1922 = vadd.f32 %v1777, %v1916
    %s1923 = sld [smem:[#allocation2 + $0x53]]
    %v1924 = vstv %s1923
    %v1925 = vmul.f32 %v1924, %v80
    %v1926 = vmul.f32 %v1924, %v81
    %v1927 = vmul.f32 %v1924, %v82
    %v1931 = vrot.slane %v1925, 4
    %v1932 = vrot.slane %v1926, 4
    %v1933 = vsel %vm121, %v1931, %v1932
    %v1934 = vrot.slane %v1927, 4
    %v1935 = vsel %vm121, %v1932, %v1934
    %1936 = vrot.lane.b32.xlu0 %v1933, 122
    %v1937 = vpop.permute.xlu0 %1936
    %1938 = vrot.lane.b32.xlu0 %v1935, 122
    %v1939 = vpop.permute.xlu0 %1938
    %v1942 = vadd.f32 %v1861, %v1937
    %v1943 = vadd.f32 %v1862, %v1939
    %s1944 = sld [smem:[#allocation2 + $0x5a]]
    %v1945 = vstv %s1944
    %v1946 = vmul.f32 %v1945, %v80
    %v1947 = vmul.f32 %v1945, %v81
    %v1948 = vmul.f32 %v1945, %v82
    %v1952 = vrot.slane %v1946, 4
    %v1953 = vrot.slane %v1947, 4
    %v1954 = vsel %vm121, %v1952, %v1953
    %v1955 = vrot.slane %v1948, 4
    %v1956 = vsel %vm121, %v1953, %v1955
    %1957 = vrot.lane.b32.xlu0 %v1954, 122
    %v1958 = vpop.permute.xlu0 %1957
    %1959 = vrot.lane.b32.xlu0 %v1956, 122
    %v1960 = vpop.permute.xlu0 %1959
    %1961 = vrot.lane.b32.xlu0 %v1955, 122
    %v1962 = vpop.permute.xlu0 %1961
    %v1966 = vadd.f32 %v1880, %v1958
    %v1967 = vadd.f32 %v1881, %v1960
    %v1968 = vadd.f32 %v1882, %v1962
    %s1969 = sld [smem:[#allocation2 + $0x61]]
    %v1970 = vstv %s1969
    %v1971 = vmul.f32 %v1970, %v80
    %v1972 = vmul.f32 %v1970, %v81
    %v1973 = vmul.f32 %v1970, %v82
    %v1977 = vrot.slane %v1971, 4
    %v1978 = vrot.slane %v1972, 4
    %v1979 = vsel %vm121, %v1977, %v1978
    %v1980 = vrot.slane %v1973, 4
    %v1981 = vsel %vm121, %v1978, %v1980
    %1982 = vrot.lane.b32.xlu0 %v1979, 122
    %v1983 = vpop.permute.xlu0 %1982
    %1984 = vrot.lane.b32.xlu0 %v1981, 122
    %v1985 = vpop.permute.xlu0 %1984
    %1986 = vrot.lane.b32.xlu0 %v1980, 122
    %v1987 = vpop.permute.xlu0 %1986
    %v1991 = vadd.f32 %v1900, %v1983
    %v1992 = vadd.f32 %v1901, %v1985
    %v1993 = vadd.f32 %v1902, %v1987
    %vm1997 = vcmask 1046528
    %v1998 = vrot.slane %v1966, 1
    %v1999 = vrot.slane %v1967, 1
    %v2000 = vsel %vm1997, %v1998, %v1999
    %v2001 = vrot.slane %v1968, 1
    %v2002 = vsel %vm1997, %v1999, %v2001
    %v2005 = vadd.f32 %v1942, %v2000
    %v2006 = vadd.f32 %v1943, %v2002
    %v2010 = vrot.slane %v1920, 1
    %v2011 = vrot.slane %v1921, 1
    %v2012 = vsel %vm1997, %v2010, %v2011
    %v2013 = vrot.slane %v1922, 1
    %v2014 = vsel %vm1997, %v2011, %v2013
    %v2018 = vadd.f32 %v1991, %v2012
    %v2019 = vadd.f32 %v1992, %v2014
    %v2020 = vadd.f32 %v1993, %v2013
    %vm2024 = vcmask 1045504
    %v2025 = vrot.slane %v2018, 2
    %v2026 = vrot.slane %v2019, 2
    %v2027 = vsel %vm2024, %v2025, %v2026
    %v2028 = vrot.slane %v2020, 2
    %v2029 = vsel %vm2024, %v2026, %v2028
    %v2032 = vadd.f32 %v2005, %v2027
    %v2033 = vadd.f32 %v2006, %v2029
    %v2034 = vxor.u32 %v2032, 2147483648
    %v2035 = vxor.u32 %v2033, 2147483648
    %v2036 = vmul.f32 %v2034, 1.442695
    %v2037 = vpow.pop %v2036
    %v2038 = vmul.f32 %v2035, 1.442695
    %v2039 = vpow.pop %v2038
    %v2040 = vadd.f32 %v2037, 1.0
    %v2041 = vadd.f32 %v2039, 1.0
    %v2042 = vrcp.pop %v2040
    %v2043 = vmul.f32 1.0, %v2042
    %v2044 = vrcp.pop %v2041
    %v2045 = vmul.f32 1.0, %v2044
    %vm2046 = vcmask 359424
    %2047 = vst.msk [vmem:[%s2] sm:$0xff] %vm2046, %v2043
    %2048 = vst.msk [vmem:[%s2 + $0x8] sm:$0xff] %vm2046, %v2045
    // Predicated region
    $region14: #{modulate1_forward.1} parent=1 // pred_check
      _
    $region15: #{modulate1_forward.1} parent=1 // pred_check_branch
      %2050 = sbr.rel (0) target = $region17
    $region16: #{modulate1_forward.1} parent=1 // pred_region
      _
    $region17: #{modulate1_forward.1} parent=1 // pred_fallthru
      _
    // Predicated region
    $region18: #{modulate1_forward.1} parent=1 // pred_check
      _
    $region19: #{modulate1_forward.1} parent=1 // pred_check_branch
      %2052 = sbr.rel (0) target = $region21
    $region20: #{modulate1_forward.1} parent=1 // pred_region
      _
    $region21: #{modulate1_forward.1} parent=1 // pred_fallthru
      _
    %2053 = vsyncpa [#allocation3], 1

</llo_original>
